<compile_context>
chip_gen: v7x
topology: tpu7x:2x2x1
jax: 0.10.0
libtpu: 0.0.40
codegen_flags: <defaults>
</compile_context>

<pallas_src>
import functools

import jax
import jax.numpy as jnp
from jax import lax
from jax.experimental import pallas as pl
from jax.experimental.pallas import tpu as pltpu


def _cbp_fwd_kernel(x1_ref, x2_ref, w1_ref, w2_ref, o_ref, *, block_b, hw, d):
    # x1_ref: (block_b*hw, C1) bf16      x2_ref: (block_b*hw, C2) bf16
    # w1_ref: (C1, 2D) bf16 = [S1@cos | S1@sin]   w2_ref: (C2, 2D) bf16 = [S2@cos | S2@sin]
    # o_ref:  (block_b, 2D) f32 = [ sum_hw Re(P) | sum_hw -Im(P) ],  P = FFT(p)*FFT(q)
    a = jnp.dot(x1_ref[...], w1_ref[...], preferred_element_type=jnp.float32)  # (rows, 2D)
    b = jnp.dot(x2_ref[...], w2_ref[...], preferred_element_type=jnp.float32)  # (rows, 2D)

    # Lane-aligned static slices (D is a multiple of 128 in practice) -> free.
    a_re, a_im = a[:, :d], a[:, d:]     # a_re =  Re(FFT(p)),  a_im = -Im(FFT(p))
    b_re, b_im = b[:, :d], b[:, d:]

    # Complex product P = FFT(p) * FFT(q):
    #   pr =  Re(P) = a_re*b_re - a_im*b_im
    #   pn = -Im(P) = a_re*b_im + a_im*b_re
    pr = a_re * b_re - a_im * b_im
    pn = a_re * b_im + a_im * b_re

    # IDFT is linear -> sum-pool the spectrum over spatial locations before the inverse DFT
    # (which is hoisted out of the kernel).  hw is padded to a multiple of 8 so this reshape
    # stays on sublane-tile boundaries.
    o_ref[:, :d] = jnp.sum(pr.reshape(block_b, hw, d), axis=1)
    o_ref[:, d:] = jnp.sum(pn.reshape(block_b, hw, d), axis=1)


def _choose_block_b(batch, hw, target_rows=512):
    """Largest divisor of `batch` with block_b*hw <= target_rows (at least 1).

    target_rows sizes the MXU streaming (M) dimension: ~512 rows fills the 256-wide
    v6e/v7x MXU and amortizes the ~0.35us per-grid-step overhead while keeping the f32
    intermediates (~6*rows*D*4 B) comfortably inside VMEM up to D ~ 2048.
    """
    # TODO(synk): on v7x prefer >= 2 grid steps (halve block_b) so the "parallel" batch
    #             axis can shard across its two TensorCores.
    want = max(1, target_rows // max(hw, 1))
    best = 1
    for cand in range(1, batch + 1):
        if batch % cand == 0 and cand <= want:
            best = cand
    return best


def _vmem_limit_bytes(rows, c1, c2, d, block_b):
    act = 2 * rows * (c1 + c2) * 2            # double-buffered bf16 activation blocks
    wgt = 2 * (c1 + c2) * (2 * d) * 2         # double-buffered bf16 fused sketch-DFT weights
    out = 2 * block_b * (2 * d) * 4           # double-buffered f32 pooled-spectrum output
    tmp = 8 * rows * d * 4                    # a, b, pr, pn f32 intermediates (+ headroom)
    est = act + wgt + out + tmp + (4 << 20)
    # Clamp to a budget that is safe on every current generation (v7x has 64 MiB / TC).
    return int(max(32 << 20, min(est, 60 << 20)))


@functools.partial(jax.jit, static_argnames=("block_b",))
def bilinear_pooling(x1_nchw, x2_nchw, s1, s2, dft_cos, dft_sin, block_b=None):
    B, C1, H, W = x1_nchw.shape
    _, C2, _, _ = x2_nchw.shape
    D = dft_cos.shape[0]
    HW = H * W
    hw_pad = ((HW + 7) // 8) * 8              # sublane-tile-aligned spatial extent

    if block_b is None:
        block_b = _choose_block_b(B, hw_pad)
    if B % block_b != 0:
        raise ValueError(f"block_b={block_b} must divide batch={B}")
    grid_b = B // block_b
    rows = block_b * hw_pad

    # NCHW -> (B*hw_pad, C) channels-last bf16 tokens.  Zero-padded spatial rows contribute
    # exactly zero to the pooled spectrum.  allow_input_fusion below permits XLA to fuse
    # this relayout into the Pallas input where the backend supports it.
    def to_tokens(x, c):
        t = jnp.transpose(x, (0, 2, 3, 1)).reshape(B, HW, c).astype(jnp.bfloat16)
        if hw_pad != HW:
            t = jnp.pad(t, ((0, 0), (0, hw_pad - HW), (0, 0)))
        return t.reshape(B * hw_pad, c)

    x1 = to_tokens(x1_nchw, C1)
    x2 = to_tokens(x2_nchw, C2)

    # Fuse the (sparse) count-sketch into the forward DFT and concat the cos/sin halves so
    # the kernel needs a single (C, 2D) matmul per input.  (In a real model these are
    # constants precomputed at init, not re-built per call.)
    f32 = jnp.float32
    cosm = dft_cos.astype(f32)
    sinm = dft_sin.astype(f32)
    w1 = jnp.concatenate([s1.astype(f32) @ cosm, s1.astype(f32) @ sinm], axis=1).astype(jnp.bfloat16)
    w2 = jnp.concatenate([s2.astype(f32) @ cosm, s2.astype(f32) @ sinm], axis=1).astype(jnp.bfloat16)

    kernel = functools.partial(_cbp_fwd_kernel, block_b=block_b, hw=hw_pad, d=D)

    spec = pl.pallas_call(
        kernel,
        out_shape=jax.ShapeDtypeStruct((B, 2 * D), jnp.float32),
        grid=(grid_b,),
        in_specs=[
            pl.BlockSpec((rows, C1), lambda b: (b, 0)),
            pl.BlockSpec((rows, C2), lambda b: (b, 0)),
            pl.BlockSpec((C1, 2 * D), lambda b: (0, 0)),
            pl.BlockSpec((C2, 2 * D), lambda b: (0, 0)),
        ],
        out_specs=pl.BlockSpec((block_b, 2 * D), lambda b: (b, 0)),
        compiler_params=pltpu.CompilerParams(
            dimension_semantics=("parallel",),
            allow_input_fusion=[True, True, False, False],
            vmem_limit_bytes=_vmem_limit_bytes(rows, C1, C2, D, block_b),
        ),
    )(x1, x2, w1, w2)

    # Hoisted inverse DFT + L2 normalize: one full-batch (B, 2D) @ (2D, D) matmul + rsqrt.
    #   c = (1/D) * (Re(P)@cos + (-Im(P))@sin)     then F.normalize(dim=1) with eps=1e-12.
    # TODO(synk): no Pallas FFT primitive exists; the FFT/IFFT is realized as dense DFT
    #             matmuls (forward fused into the sketch weights, inverse applied here).
    idft = jnp.concatenate([cosm, sinm], axis=0)                       # (2D, D)
    pooled = jnp.dot(spec, idft, preferred_element_type=jnp.float32) * (1.0 / D)
    sq = jnp.sum(pooled * pooled, axis=1, keepdims=True)
    return pooled * lax.rsqrt(jnp.maximum(sq, 1e-24))                  # == x / max(||x||, 1e-12)


def make_count_sketch(key, in_dim, out_dim):
    """Dense representation of the sparse count-sketch matrix (in_dim, out_dim)."""
    kh, ks = jax.random.split(key)
    h = jax.random.randint(kh, (in_dim,), 0, out_dim)
    s = (jax.random.randint(ks, (in_dim,), 0, 2) * 2 - 1).astype(jnp.float32)
    mat = jnp.zeros((in_dim, out_dim), jnp.float32)
    mat = mat.at[jnp.arange(in_dim), h].set(s)
    return mat


def make_dft_mats(d):
    n = jnp.arange(d, dtype=jnp.float32)
    ang = 2.0 * jnp.pi * jnp.outer(n, n) / d
    return jnp.cos(ang).astype(jnp.float32), jnp.sin(ang).astype(jnp.float32)


def reference_bilinear_pooling(x1_nchw, x2_nchw, s1, s2):
    """Pure-JAX reference (uses jnp.fft) mirroring the PyTorch CBP forward."""
    B, C1, H, W = x1_nchw.shape
    p = jnp.einsum("bchw,cd->bhwd", x1_nchw.astype(jnp.float32), s1).reshape(B, H * W, -1)
    q = jnp.einsum("bchw,cd->bhwd", x2_nchw.astype(jnp.float32), s2).reshape(B, H * W, -1)
    fp = jnp.fft.fft(p, axis=-1)
    fq = jnp.fft.fft(q, axis=-1)
    conv = jnp.real(jnp.fft.ifft(fp * fq, axis=-1))
    pooled = conv.sum(axis=1)  # sum_pool=True
    norm = jnp.maximum(jnp.linalg.norm(pooled, axis=1, keepdims=True), 1e-12)
    return pooled / norm


if __name__ == "__main__":
    # Small shapes consistent with the module (defaults 512/128/512 scaled down) but large
    # enough that block_b*HW = 256 MXU rows per grid step.
    B, C1, C2, H, W, D = 4, 128, 64, 8, 8, 256

    key = jax.random.PRNGKey(0)
    k_x1, k_x2, k_s1, k_s2 = jax.random.split(key, 4)

    x1 = jax.random.normal(k_x1, (B, C1, H, W), jnp.float32)
    x2 = jax.random.normal(k_x2, (B, C2, H, W), jnp.float32)

    s1 = make_count_sketch(k_s1, C1, D)
    s2 = make_count_sketch(k_s2, C2, D)
    dft_cos, dft_sin = make_dft_mats(D)

    out = bilinear_pooling(x1, x2, s1, s2, dft_cos, dft_sin)
    out = jax.block_until_ready(out)

    ref = reference_bilinear_pooling(x1, x2, s1, s2)
    assert out.shape == (B, D)
    # bf16 MXU operands on the fused sketch+DFT path -> ~1e-3 error on the L2-normalized
    # output; 1e-2 tolerance vs. the f32 jnp.fft reference.
    max_err = float(jnp.max(jnp.abs(out - ref)))
    assert jnp.allclose(out, ref, atol=1e-2, rtol=1e-2), max_err

    print("KERNEL_OK")
</pallas_src>

<mosaic_0001>
module attributes {stable_mosaic.version = 11 : i64} {
  func.func @_cbp_fwd_kernel(%arg0: i32, %arg1: memref<256x128xbf16, #tpu.memory_space<vmem>>, %arg2: memref<256x64xbf16, #tpu.memory_space<vmem>>, %arg3: memref<128x512xbf16, #tpu.memory_space<vmem>>, %arg4: memref<64x512xbf16, #tpu.memory_space<vmem>>, %arg5: memref<4x512xf32, #tpu.memory_space<vmem>>) attributes {dimension_semantics = [#tpu.dimension_semantics<parallel>], iteration_bounds = array<i64: 1>, scalar_prefetch = 0 : i64, scratch_operands = 0 : i64, tpu.core_type = #tpu.core_type<tc>, window_params = [{transform_indices = @transform_0, window_bounds = array<i64: 256, 128>}, {transform_indices = @transform_1, window_bounds = array<i64: 256, 64>}, {pipeline_mode = #tpu.pipeline_mode<synchronous>, transform_indices = @transform_2, window_bounds = array<i64: 128, 512>}, {pipeline_mode = #tpu.pipeline_mode<synchronous>, transform_indices = @transform_3, window_bounds = array<i64: 64, 512>}, {transform_indices = @transform_4, window_bounds = array<i64: 4, 512>}]} {
    %c0 = arith.constant 0 : index
    %c0_0 = arith.constant 0 : index
    %0 = vector.load %arg1[%c0, %c0_0] : memref<256x128xbf16, #tpu.memory_space<vmem>>, vector<256x128xbf16>
    %c0_1 = arith.constant 0 : index
    %c0_2 = arith.constant 0 : index
    %1 = vector.load %arg3[%c0_1, %c0_2] : memref<128x512xbf16, #tpu.memory_space<vmem>>, vector<128x512xbf16>
    %cst = arith.constant dense<0.000000e+00> : vector<256x512xf32>
    %2 = tpu.matmul %0, %1, %cst {dimension_numbers = #tpu.dot_dimension_numbers<[1], [0], [0], [1], [0, 0, 1, 1], [], []>} : vector<256x128xbf16>, vector<128x512xbf16>, vector<256x512xf32> -> vector<256x512xf32>
    %c0_3 = arith.constant 0 : index
    %c0_4 = arith.constant 0 : index
    %3 = vector.load %arg2[%c0_3, %c0_4] : memref<256x64xbf16, #tpu.memory_space<vmem>>, vector<256x64xbf16>
    %c0_5 = arith.constant 0 : index
    %c0_6 = arith.constant 0 : index
    %4 = vector.load %arg4[%c0_5, %c0_6] : memref<64x512xbf16, #tpu.memory_space<vmem>>, vector<64x512xbf16>
    %cst_7 = arith.constant dense<0.000000e+00> : vector<256x512xf32>
    %5 = tpu.matmul %3, %4, %cst_7 {dimension_numbers = #tpu.dot_dimension_numbers<[1], [0], [0], [1], [0, 0, 1, 1], [], []>} : vector<256x64xbf16>, vector<64x512xbf16>, vector<256x512xf32> -> vector<256x512xf32>
    %6 = vector.extract_strided_slice %2 {offsets = [0, 0], sizes = [256, 256], strides = [1, 1]} : vector<256x512xf32> to vector<256x256xf32>
    %7 = vector.extract_strided_slice %2 {offsets = [0, 256], sizes = [256, 256], strides = [1, 1]} : vector<256x512xf32> to vector<256x256xf32>
    %8 = vector.extract_strided_slice %5 {offsets = [0, 0], sizes = [256, 256], strides = [1, 1]} : vector<256x512xf32> to vector<256x256xf32>
    %9 = vector.extract_strided_slice %5 {offsets = [0, 256], sizes = [256, 256], strides = [1, 1]} : vector<256x512xf32> to vector<256x256xf32>
    %10 = arith.mulf %6, %8 : vector<256x256xf32>
    %11 = arith.mulf %7, %9 : vector<256x256xf32>
    %12 = arith.subf %10, %11 : vector<256x256xf32>
    %13 = arith.mulf %6, %9 : vector<256x256xf32>
    %14 = arith.mulf %7, %8 : vector<256x256xf32>
    %15 = arith.addf %13, %14 : vector<256x256xf32>
    %16 = vector.shape_cast %12 : vector<256x256xf32> to vector<4x64x256xf32>
    %cst_8 = arith.constant dense<0.000000e+00> : vector<4x256xf32>
    %17 = vector.multi_reduction <add>, %16, %cst_8 [1] : vector<4x64x256xf32> to vector<4x256xf32>
    %c0_9 = arith.constant 0 : index
    %c0_10 = arith.constant 0 : index
    %18 = vector.load %arg5[%c0_9, %c0_10] : memref<4x512xf32, #tpu.memory_space<vmem>>, vector<4x256xf32>
    tpu.vector_store %arg5[%c0_9, %c0_10], %17 {strides = array<i32>} : memref<4x512xf32, #tpu.memory_space<vmem>>, vector<4x256xf32>,
    %19 = vector.shape_cast %15 : vector<256x256xf32> to vector<4x64x256xf32>
    %cst_11 = arith.constant dense<0.000000e+00> : vector<4x256xf32>
    %20 = vector.multi_reduction <add>, %19, %cst_11 [1] : vector<4x64x256xf32> to vector<4x256xf32>
    %c0_12 = arith.constant 0 : index
    %c256 = arith.constant 256 : index
    %21 = vector.load %arg5[%c0_12, %c256] : memref<4x512xf32, #tpu.memory_space<vmem>>, vector<4x256xf32>
    tpu.vector_store %arg5[%c0_12, %c256], %20 {strides = array<i32>} : memref<4x512xf32, #tpu.memory_space<vmem>>, vector<4x256xf32>,
    return
  }
  func.func @transform_0(%arg0: i32) -> (i32, i32) {
    %c0_i32 = arith.constant 0 : i32
    %c0_i32_0 = arith.constant 0 : i32
    return %arg0, %c0_i32 : i32, i32
  }
  func.func @transform_1(%arg0: i32) -> (i32, i32) {
    %c0_i32 = arith.constant 0 : i32
    %c0_i32_0 = arith.constant 0 : i32
    return %arg0, %c0_i32 : i32, i32
  }
  func.func @transform_2(%arg0: i32) -> (i32, i32) {
    %c0_i32 = arith.constant 0 : i32
    %c0_i32_0 = arith.constant 0 : i32
    %c0_i32_1 = arith.constant 0 : i32
    return %c0_i32, %c0_i32_0 : i32, i32
  }
  func.func @transform_3(%arg0: i32) -> (i32, i32) {
    %c0_i32 = arith.constant 0 : i32
    %c0_i32_0 = arith.constant 0 : i32
    %c0_i32_1 = arith.constant 0 : i32
    return %c0_i32, %c0_i32_0 : i32, i32
  }
  func.func @transform_4(%arg0: i32) -> (i32, i32) {
    %c0_i32 = arith.constant 0 : i32
    %c0_i32_0 = arith.constant 0 : i32
    return %arg0, %c0_i32 : i32, i32
  }
}

</mosaic_0001>

<llo_original>
// kernel: bilinear_pooling.1
$region0: #{bilinear_pooling.1}
  #allocation0 [shape = 'u32[]', space=smem, size = 0x4, offset = 0x4, fixed_abs, tag = 'smem constant byte address 0x4 - core index']
  #allocation1 [shape = 'u32[144,128]{1,0:T(1,128)}', space=vmem, size = 0x12000, scoped, tag = 'internal scratch']
  %s0 = inlined_call_operand.vmem [shape: bf16[256,128], index: 0, kind: input, shape index: {}]
  %s1 = inlined_call_operand.vmem [shape: bf16[256,64], index: 1, kind: input, shape index: {}]
  %s2 = inlined_call_operand.vmem [shape: bf16[128,512], index: 2, kind: input, shape index: {}]
  %s3 = inlined_call_operand.vmem [shape: bf16[64,512], index: 3, kind: input, shape index: {}]
  %s4 = inlined_call_operand.vmem [shape: f32[4,512], index: 4, kind: output, shape index: {}]
  %s5 = sld [smem:[#allocation0]]
  $region26: #{bilinear_pooling.1} parent=0
    _
  %s7 = ssub.s32 1, %s5
  %s8 = scalar_select 0, %s7, %s5
  // Predicated region
  $region2: #{bilinear_pooling.1} parent=0 // pred_check
    _
  $region3: #{bilinear_pooling.1} parent=0 // pred_check_branch
    %10 = sbr.rel (0) target = $region5
  $region4: #{bilinear_pooling.1} parent=0 // pred_region
    _
  $region5: #{bilinear_pooling.1} parent=0 // pred_fallthru
    _
  // Predicated region
  $region6: #{bilinear_pooling.1} parent=0 // pred_check
    _
  $region7: #{bilinear_pooling.1} parent=0 // pred_check_branch
    %12 = sbr.rel (0) target = $region9
  $region8: #{bilinear_pooling.1} parent=0 // pred_region
    _
  $region9: #{bilinear_pooling.1} parent=0 // pred_fallthru
    _
  // Predicated region
  $region10: #{bilinear_pooling.1} parent=0 // pred_check
    _
  $region11: #{bilinear_pooling.1} parent=0 // pred_check_branch
    %14 = sbr.rel (0) target = $region13
  $region12: #{bilinear_pooling.1} parent=0 // pred_region
    _
  $region13: #{bilinear_pooling.1} parent=0 // pred_fallthru
    _
  // Predicated region
  $region14: #{bilinear_pooling.1} parent=0 // pred_check
    _
  $region15: #{bilinear_pooling.1} parent=0 // pred_check_branch
    %16 = sbr.rel (0) target = $region17
  $region16: #{bilinear_pooling.1} parent=0 // pred_region
    _
  $region17: #{bilinear_pooling.1} parent=0 // pred_fallthru
    _
  %v18 = vld [vmem:[%s0] sm:$0xf]
  %v19 = vld [vmem:[%s0 + $0x4] sm:$0xf]
  %v20 = vld [vmem:[%s0 + $0x8] sm:$0xf]
  %v21 = vld [vmem:[%s0 + $0xc] sm:$0xf]
  %v22 = vld [vmem:[%s0 + $0x10] sm:$0xf]
  %v23 = vld [vmem:[%s0 + $0x14] sm:$0xf]
  %v24 = vld [vmem:[%s0 + $0x18] sm:$0xf]
  %v25 = vld [vmem:[%s0 + $0x1c] sm:$0xf]
  %v26 = vld [vmem:[%s0 + $0x20] sm:$0xf]
  %v27 = vld [vmem:[%s0 + $0x24] sm:$0xf]
  %v28 = vld [vmem:[%s0 + $0x28] sm:$0xf]
  %v29 = vld [vmem:[%s0 + $0x2c] sm:$0xf]
  %v30 = vld [vmem:[%s0 + $0x30] sm:$0xf]
  %v31 = vld [vmem:[%s0 + $0x34] sm:$0xf]
  %v32 = vld [vmem:[%s0 + $0x38] sm:$0xf]
  %v33 = vld [vmem:[%s0 + $0x3c] sm:$0xf]
  %v34 = vld [vmem:[%s0 + $0x40] sm:$0xf]
  %v35 = vld [vmem:[%s0 + $0x44] sm:$0xf]
  %v36 = vld [vmem:[%s0 + $0x48] sm:$0xf]
  %v37 = vld [vmem:[%s0 + $0x4c] sm:$0xf]
  %v38 = vld [vmem:[%s0 + $0x50] sm:$0xf]
  %v39 = vld [vmem:[%s0 + $0x54] sm:$0xf]
  %v40 = vld [vmem:[%s0 + $0x58] sm:$0xf]
  %v41 = vld [vmem:[%s0 + $0x5c] sm:$0xf]
  %v42 = vld [vmem:[%s0 + $0x60] sm:$0xf]
  %v43 = vld [vmem:[%s0 + $0x64] sm:$0xf]
  %v44 = vld [vmem:[%s0 + $0x68] sm:$0xf]
  %v45 = vld [vmem:[%s0 + $0x6c] sm:$0xf]
  %v46 = vld [vmem:[%s0 + $0x70] sm:$0xf]
  %v47 = vld [vmem:[%s0 + $0x74] sm:$0xf]
  %v48 = vld [vmem:[%s0 + $0x78] sm:$0xf]
  %v49 = vld [vmem:[%s0 + $0x7c] sm:$0xf]
  %v50 = vld [vmem:[%s2] sm:$0xff]
  %v51 = vld [vmem:[%s2 + $0x8] sm:$0xff]
  %v52 = vld [vmem:[%s2 + $0x10] sm:$0xff]
  %v53 = vld [vmem:[%s2 + $0x18] sm:$0xff]
  %v54 = vld [vmem:[%s2 + $0x20] sm:$0xff]
  %v55 = vld [vmem:[%s2 + $0x28] sm:$0xff]
  %v56 = vld [vmem:[%s2 + $0x30] sm:$0xff]
  %v57 = vld [vmem:[%s2 + $0x38] sm:$0xff]
  %v58 = vld [vmem:[%s2 + $0x40] sm:$0xff]
  %v59 = vld [vmem:[%s2 + $0x48] sm:$0xff]
  %v60 = vld [vmem:[%s2 + $0x50] sm:$0xff]
  %v61 = vld [vmem:[%s2 + $0x58] sm:$0xff]
  %v62 = vld [vmem:[%s2 + $0x60] sm:$0xff]
  %v63 = vld [vmem:[%s2 + $0x68] sm:$0xff]
  %v64 = vld [vmem:[%s2 + $0x70] sm:$0xff]
  %v65 = vld [vmem:[%s2 + $0x78] sm:$0xff]
  %v66 = vld [vmem:[%s2 + $0x80] sm:$0xff]
  %v67 = vld [vmem:[%s2 + $0x88] sm:$0xff]
  %v68 = vld [vmem:[%s2 + $0x90] sm:$0xff]
  %v69 = vld [vmem:[%s2 + $0x98] sm:$0xff]
  %v70 = vld [vmem:[%s2 + $0xa0] sm:$0xff]
  %v71 = vld [vmem:[%s2 + $0xa8] sm:$0xff]
  %v72 = vld [vmem:[%s2 + $0xb0] sm:$0xff]
  %v73 = vld [vmem:[%s2 + $0xb8] sm:$0xff]
  %v74 = vld [vmem:[%s2 + $0xc0] sm:$0xff]
  %v75 = vld [vmem:[%s2 + $0xc8] sm:$0xff]
  %v76 = vld [vmem:[%s2 + $0xd0] sm:$0xff]
  %v77 = vld [vmem:[%s2 + $0xd8] sm:$0xff]
  %v78 = vld [vmem:[%s2 + $0xe0] sm:$0xff]
  %v79 = vld [vmem:[%s2 + $0xe8] sm:$0xff]
  %v80 = vld [vmem:[%s2 + $0xf0] sm:$0xff]
  %v81 = vld [vmem:[%s2 + $0xf8] sm:$0xff]
  %v114 = vunpack.c.l.b16 %v18
  %v115 = vunpack.c.l.b16 %v19
  %v116 = vunpack.c.l.b16 %v20
  %v117 = vunpack.c.l.b16 %v21
  %v118 = vunpack.c.l.b16 %v22
  %v119 = vunpack.c.l.b16 %v23
  %v120 = vunpack.c.l.b16 %v24
  %v121 = vunpack.c.l.b16 %v25
  %v122 = vunpack.c.l.b16 %v26
  %v123 = vunpack.c.l.b16 %v27
  %v124 = vunpack.c.l.b16 %v28
  %v125 = vunpack.c.l.b16 %v29
  %v126 = vunpack.c.l.b16 %v30
  %v127 = vunpack.c.l.b16 %v31
  %v128 = vunpack.c.l.b16 %v32
  %v129 = vunpack.c.l.b16 %v33
  %v130 = vunpack.c.l.b16 %v34
  %v131 = vunpack.c.l.b16 %v35
  %v132 = vunpack.c.l.b16 %v36
  %v133 = vunpack.c.l.b16 %v37
  %v134 = vunpack.c.l.b16 %v38
  %v135 = vunpack.c.l.b16 %v39
  %v136 = vunpack.c.l.b16 %v40
  %v137 = vunpack.c.l.b16 %v41
  %v138 = vunpack.c.l.b16 %v42
  %v139 = vunpack.c.l.b16 %v43
  %v140 = vunpack.c.l.b16 %v44
  %v141 = vunpack.c.l.b16 %v45
  %v142 = vunpack.c.l.b16 %v46
  %v143 = vunpack.c.l.b16 %v47
  %v144 = vunpack.c.l.b16 %v48
  %v145 = vunpack.c.l.b16 %v49
  %v146 = vpack.c.b16 %v115, %v114
  %v147 = vpack.c.b16 %v117, %v116
  %v148 = vpack.c.b16 %v119, %v118
  %v149 = vpack.c.b16 %v121, %v120
  %v150 = vpack.c.b16 %v123, %v122
  %v151 = vpack.c.b16 %v125, %v124
  %v152 = vpack.c.b16 %v127, %v126
  %v153 = vpack.c.b16 %v129, %v128
  %v154 = vpack.c.b16 %v131, %v130
  %v155 = vpack.c.b16 %v133, %v132
  %v156 = vpack.c.b16 %v135, %v134
  %v157 = vpack.c.b16 %v137, %v136
  %v158 = vpack.c.b16 %v139, %v138
  %v159 = vpack.c.b16 %v141, %v140
  %v160 = vpack.c.b16 %v143, %v142
  %v161 = vpack.c.b16 %v145, %v144
  %v210 = vunpack.c.l.b16 %v50
  %v211 = vunpack.c.h.b16 %v50
  %v212 = vunpack.c.l.b16 %v51
  %v213 = vunpack.c.h.b16 %v51
  %v214 = vunpack.c.l.b16 %v52
  %v215 = vunpack.c.h.b16 %v52
  %v216 = vunpack.c.l.b16 %v53
  %v217 = vunpack.c.h.b16 %v53
  %v218 = vunpack.c.l.b16 %v54
  %v219 = vunpack.c.h.b16 %v54
  %v220 = vunpack.c.l.b16 %v55
  %v221 = vunpack.c.h.b16 %v55
  %v222 = vunpack.c.l.b16 %v56
  %v223 = vunpack.c.h.b16 %v56
  %v224 = vunpack.c.l.b16 %v57
  %v225 = vunpack.c.h.b16 %v57
  %v226 = vunpack.c.l.b16 %v58
  %v227 = vunpack.c.h.b16 %v58
  %v228 = vunpack.c.l.b16 %v59
  %v229 = vunpack.c.h.b16 %v59
  %v230 = vunpack.c.l.b16 %v60
  %v231 = vunpack.c.h.b16 %v60
  %v232 = vunpack.c.l.b16 %v61
  %v233 = vunpack.c.h.b16 %v61
  %v234 = vunpack.c.l.b16 %v62
  %v235 = vunpack.c.h.b16 %v62
  %v236 = vunpack.c.l.b16 %v63
  %v237 = vunpack.c.h.b16 %v63
  %v238 = vunpack.c.l.b16 %v64
  %v239 = vunpack.c.h.b16 %v64
  %v240 = vunpack.c.l.b16 %v65
  %v241 = vunpack.c.h.b16 %v65
  %v242 = vunpack.c.l.b16 %v66
  %v243 = vunpack.c.h.b16 %v66
  %v244 = vunpack.c.l.b16 %v67
  %v245 = vunpack.c.h.b16 %v67
  %v246 = vunpack.c.l.b16 %v68
  %v247 = vunpack.c.h.b16 %v68
  %v248 = vunpack.c.l.b16 %v69
  %v249 = vunpack.c.h.b16 %v69
  %v250 = vunpack.c.l.b16 %v70
  %v251 = vunpack.c.h.b16 %v70
  %v252 = vunpack.c.l.b16 %v71
  %v253 = vunpack.c.h.b16 %v71
  %v254 = vunpack.c.l.b16 %v72
  %v255 = vunpack.c.h.b16 %v72
  %v256 = vunpack.c.l.b16 %v73
  %v257 = vunpack.c.h.b16 %v73
  %v258 = vunpack.c.l.b16 %v74
  %v259 = vunpack.c.h.b16 %v74
  %v260 = vunpack.c.l.b16 %v75
  %v261 = vunpack.c.h.b16 %v75
  %v262 = vunpack.c.l.b16 %v76
  %v263 = vunpack.c.h.b16 %v76
  %v264 = vunpack.c.l.b16 %v77
  %v265 = vunpack.c.h.b16 %v77
  %v266 = vunpack.c.l.b16 %v78
  %v267 = vunpack.c.h.b16 %v78
  %v268 = vunpack.c.l.b16 %v79
  %v269 = vunpack.c.h.b16 %v79
  %v270 = vunpack.c.l.b16 %v80
  %v271 = vunpack.c.h.b16 %v80
  %v272 = vunpack.c.l.b16 %v81
  %v273 = vunpack.c.h.b16 %v81
  %v274 = vpack.c.b16 %v214, %v210
  %v275 = vpack.c.b16 %v215, %v211
  %v276 = vpack.c.b16 %v216, %v212
  %v277 = vpack.c.b16 %v217, %v213
  %v278 = vpack.c.b16 %v222, %v218
  %v279 = vpack.c.b16 %v223, %v219
  %v280 = vpack.c.b16 %v224, %v220
  %v281 = vpack.c.b16 %v225, %v221
  %v282 = vpack.c.b16 %v230, %v226
  %v283 = vpack.c.b16 %v231, %v227
  %v284 = vpack.c.b16 %v232, %v228
  %v285 = vpack.c.b16 %v233, %v229
  %v286 = vpack.c.b16 %v238, %v234
  %v287 = vpack.c.b16 %v239, %v235
  %v288 = vpack.c.b16 %v240, %v236
  %v289 = vpack.c.b16 %v241, %v237
  %v290 = vpack.c.b16 %v246, %v242
  %v291 = vpack.c.b16 %v247, %v243
  %v292 = vpack.c.b16 %v248, %v244
  %v293 = vpack.c.b16 %v249, %v245
  %v294 = vpack.c.b16 %v254, %v250
  %v295 = vpack.c.b16 %v255, %v251
  %v296 = vpack.c.b16 %v256, %v252
  %v297 = vpack.c.b16 %v257, %v253
  %v298 = vpack.c.b16 %v262, %v258
  %v299 = vpack.c.b16 %v263, %v259
  %v300 = vpack.c.b16 %v264, %v260
  %v301 = vpack.c.b16 %v265, %v261
  %v302 = vpack.c.b16 %v270, %v266
  %v303 = vpack.c.b16 %v271, %v267
  %v304 = vpack.c.b16 %v272, %v268
  %v305 = vpack.c.b16 %v273, %v269
  %338 = vmatprep.subr.bf16.mxu0 %v275
  %339 = vmatpush1.bf16.msra.mxu0 %v274
  %340 = vmatprep.subr.bf16.mxu0 %v279
  %341 = vmatpush1.bf16.msra.mxu0 %v278
  %342 = vmatprep.subr.bf16.mxu0 %v283
  %343 = vmatpush1.bf16.msra.mxu0 %v282
  %344 = vmatprep.subr.bf16.mxu0 %v287
  %345 = vmatpush1.bf16.msra.mxu0 %v286
  %346 = vmatprep.subr.bf16.mxu0 %v291
  %347 = vmatpush1.bf16.msra.mxu0 %v290
  %348 = vmatprep.subr.bf16.mxu0 %v295
  %349 = vmatpush1.bf16.msra.mxu0 %v294
  %350 = vmatprep.subr.bf16.mxu0 %v299
  %351 = vmatpush1.bf16.msra.mxu0 %v298
  %352 = vmatprep.subr.bf16.mxu0 %v303
  %353 = vmatpush1.bf16.msra.mxu0 %v302
  %354 = vmatprep.subr.bf16.mxu0 0
  %355 = vmatpush1.bf16.msra.mxu0 0
  %356 = vmatprep.subr.bf16.mxu0 0
  %357 = vmatpush1.bf16.msra.mxu0 0
  %358 = vmatprep.subr.bf16.mxu0 0
  %359 = vmatpush1.bf16.msra.mxu0 0
  %360 = vmatprep.subr.bf16.mxu0 0
  %361 = vmatpush1.bf16.msra.mxu0 0
  %362 = vmatprep.subr.bf16.mxu0 0
  %363 = vmatpush1.bf16.msra.mxu0 0
  %364 = vmatprep.subr.bf16.mxu0 0
  %365 = vmatpush1.bf16.msra.mxu0 0
  %366 = vmatprep.subr.bf16.mxu0 0
  %367 = vmatpush1.bf16.msra.mxu0 0
  %368 = vmatprep.subr.bf16.mxu0 0
  %369 = vmatpush1.bf16.msra.mxu0 0
  %370 = vmatprep.mubr.bf16.mxu0 0
  %371 = vmatmul.mubr.bf16.gmra.mrb[0].mxu0 %v146
  %v372 = vpop.f32.mrb[0].mxu0
  %v373 = vadd.f32 0.0, %v372
  %v374 = vpop.f32.mrb[0].mxu0
  %v375 = vadd.f32 0.0, %v374
  %v376 = vpop.f32.mrb[0].mxu0
  %v377 = vadd.f32 0.0, %v376
  %v378 = vpop.f32.mrb[0].mxu0
  %v379 = vadd.f32 0.0, %v378
  %380 = vmatprep.mubr.bf16.mxu0 0
  %381 = vmatmul.mubr.bf16.gmra.mrb[0].mxu0 %v147
  %v382 = vpop.f32.mrb[0].mxu0
  %v383 = vadd.f32 0.0, %v382
  %v384 = vpop.f32.mrb[0].mxu0
  %v385 = vadd.f32 0.0, %v384
  %v386 = vpop.f32.mrb[0].mxu0
  %v387 = vadd.f32 0.0, %v386
  %v388 = vpop.f32.mrb[0].mxu0
  %v389 = vadd.f32 0.0, %v388
  %390 = vmatprep.mubr.bf16.mxu0 0
  %391 = vmatmul.mubr.bf16.gmra.mrb[0].mxu0 %v148
  %v392 = vpop.f32.mrb[0].mxu0
  %v393 = vadd.f32 0.0, %v392
  %v394 = vpop.f32.mrb[0].mxu0
  %v395 = vadd.f32 0.0, %v394
  %v396 = vpop.f32.mrb[0].mxu0
  %v397 = vadd.f32 0.0, %v396
  %v398 = vpop.f32.mrb[0].mxu0
  %v399 = vadd.f32 0.0, %v398
  %400 = vmatprep.mubr.bf16.mxu0 0
  %401 = vmatmul.mubr.bf16.gmra.mrb[0].mxu0 %v149
  %v402 = vpop.f32.mrb[0].mxu0
  %v403 = vadd.f32 0.0, %v402
  %v404 = vpop.f32.mrb[0].mxu0
  %v405 = vadd.f32 0.0, %v404
  %v406 = vpop.f32.mrb[0].mxu0
  %v407 = vadd.f32 0.0, %v406
  %v408 = vpop.f32.mrb[0].mxu0
  %v409 = vadd.f32 0.0, %v408
  %410 = vmatprep.mubr.bf16.mxu0 0
  %411 = vmatmul.mubr.bf16.gmra.mrb[0].mxu0 %v150
  %v412 = vpop.f32.mrb[0].mxu0
  %v413 = vadd.f32 0.0, %v412
  %v414 = vpop.f32.mrb[0].mxu0
  %v415 = vadd.f32 0.0, %v414
  %v416 = vpop.f32.mrb[0].mxu0
  %v417 = vadd.f32 0.0, %v416
  %v418 = vpop.f32.mrb[0].mxu0
  %v419 = vadd.f32 0.0, %v418
  %420 = vmatprep.mubr.bf16.mxu0 0
  %421 = vmatmul.mubr.bf16.gmra.mrb[0].mxu0 %v151
  %v422 = vpop.f32.mrb[0].mxu0
  %v423 = vadd.f32 0.0, %v422
  %v424 = vpop.f32.mrb[0].mxu0
  %v425 = vadd.f32 0.0, %v424
  %v426 = vpop.f32.mrb[0].mxu0
  %v427 = vadd.f32 0.0, %v426
  %v428 = vpop.f32.mrb[0].mxu0
  %v429 = vadd.f32 0.0, %v428
  %430 = vmatprep.mubr.bf16.mxu0 0
  %431 = vmatmul.mubr.bf16.gmra.mrb[0].mxu0 %v152
  %v432 = vpop.f32.mrb[0].mxu0
  %v433 = vadd.f32 0.0, %v432
  %v434 = vpop.f32.mrb[0].mxu0
  %v435 = vadd.f32 0.0, %v434
  %v436 = vpop.f32.mrb[0].mxu0
  %v437 = vadd.f32 0.0, %v436
  %v438 = vpop.f32.mrb[0].mxu0
  %v439 = vadd.f32 0.0, %v438
  %440 = vmatprep.mubr.bf16.mxu0 0
  %441 = vmatmul.mubr.bf16.gmra.mrb[0].mxu0 %v153
  %v442 = vpop.f32.mrb[0].mxu0
  %v443 = vadd.f32 0.0, %v442
  %v444 = vpop.f32.mrb[0].mxu0
  %v445 = vadd.f32 0.0, %v444
  %v446 = vpop.f32.mrb[0].mxu0
  %v447 = vadd.f32 0.0, %v446
  %v448 = vpop.f32.mrb[0].mxu0
  %v449 = vadd.f32 0.0, %v448
  %450 = vmatprep.mubr.bf16.mxu0 0
  %451 = vmatmul.mubr.bf16.gmra.mrb[0].mxu0 %v154
  %v452 = vpop.f32.mrb[0].mxu0
  %v453 = vadd.f32 0.0, %v452
  %v454 = vpop.f32.mrb[0].mxu0
  %v455 = vadd.f32 0.0, %v454
  %v456 = vpop.f32.mrb[0].mxu0
  %v457 = vadd.f32 0.0, %v456
  %v458 = vpop.f32.mrb[0].mxu0
  %v459 = vadd.f32 0.0, %v458
  %460 = vmatprep.mubr.bf16.mxu0 0
  %461 = vmatmul.mubr.bf16.gmra.mrb[0].mxu0 %v155
  %v462 = vpop.f32.mrb[0].mxu0
  %v463 = vadd.f32 0.0, %v462
  %v464 = vpop.f32.mrb[0].mxu0
  %v465 = vadd.f32 0.0, %v464
  %v466 = vpop.f32.mrb[0].mxu0
  %v467 = vadd.f32 0.0, %v466
  %v468 = vpop.f32.mrb[0].mxu0
  %v469 = vadd.f32 0.0, %v468
  %470 = vmatprep.mubr.bf16.mxu0 0
  %471 = vmatmul.mubr.bf16.gmra.mrb[0].mxu0 %v156
  %v472 = vpop.f32.mrb[0].mxu0
  %v473 = vadd.f32 0.0, %v472
  %v474 = vpop.f32.mrb[0].mxu0
  %v475 = vadd.f32 0.0, %v474
  %v476 = vpop.f32.mrb[0].mxu0
  %v477 = vadd.f32 0.0, %v476
  %v478 = vpop.f32.mrb[0].mxu0
  %v479 = vadd.f32 0.0, %v478
  %480 = vmatprep.mubr.bf16.mxu0 0
  %481 = vmatmul.mubr.bf16.gmra.mrb[0].mxu0 %v157
  %v482 = vpop.f32.mrb[0].mxu0
  %v483 = vadd.f32 0.0, %v482
  %v484 = vpop.f32.mrb[0].mxu0
  %v485 = vadd.f32 0.0, %v484
  %v486 = vpop.f32.mrb[0].mxu0
  %v487 = vadd.f32 0.0, %v486
  %v488 = vpop.f32.mrb[0].mxu0
  %v489 = vadd.f32 0.0, %v488
  %490 = vmatprep.mubr.bf16.mxu0 0
  %491 = vmatmul.mubr.bf16.gmra.mrb[0].mxu0 %v158
  %v492 = vpop.f32.mrb[0].mxu0
  %v493 = vadd.f32 0.0, %v492
  %v494 = vpop.f32.mrb[0].mxu0
  %v495 = vadd.f32 0.0, %v494
  %v496 = vpop.f32.mrb[0].mxu0
  %v497 = vadd.f32 0.0, %v496
  %v498 = vpop.f32.mrb[0].mxu0
  %v499 = vadd.f32 0.0, %v498
  %500 = vmatprep.mubr.bf16.mxu0 0
  %501 = vmatmul.mubr.bf16.gmra.mrb[0].mxu0 %v159
  %v502 = vpop.f32.mrb[0].mxu0
  %v503 = vadd.f32 0.0, %v502
  %v504 = vpop.f32.mrb[0].mxu0
  %v505 = vadd.f32 0.0, %v504
  %v506 = vpop.f32.mrb[0].mxu0
  %v507 = vadd.f32 0.0, %v506
  %v508 = vpop.f32.mrb[0].mxu0
  %v509 = vadd.f32 0.0, %v508
  %510 = vmatprep.mubr.bf16.mxu0 0
  %511 = vmatmul.mubr.bf16.gmra.mrb[0].mxu0 %v160
  %v512 = vpop.f32.mrb[0].mxu0
  %v513 = vadd.f32 0.0, %v512
  %v514 = vpop.f32.mrb[0].mxu0
  %v515 = vadd.f32 0.0, %v514
  %v516 = vpop.f32.mrb[0].mxu0
  %v517 = vadd.f32 0.0, %v516
  %v518 = vpop.f32.mrb[0].mxu0
  %v519 = vadd.f32 0.0, %v518
  %520 = vmatprep.mubr.bf16.mxu0 0
  %521 = vmatmul.mubr.bf16.gmra.mrb[0].mxu0 %v161
  %v522 = vpop.f32.mrb[0].mxu0
  %v523 = vadd.f32 0.0, %v522
  %v524 = vpop.f32.mrb[0].mxu0
  %v525 = vadd.f32 0.0, %v524
  %v526 = vpop.f32.mrb[0].mxu0
  %v527 = vadd.f32 0.0, %v526
  %v528 = vpop.f32.mrb[0].mxu0
  %v529 = vadd.f32 0.0, %v528
  %530 = vdwg.mxu0
  %531 = vmatprep.subr.bf16.mxu0 %v277
  %532 = vmatpush1.bf16.msra.mxu0 %v276
  %533 = vmatprep.subr.bf16.mxu0 %v281
  %534 = vmatpush1.bf16.msra.mxu0 %v280
  %535 = vmatprep.subr.bf16.mxu0 %v285
  %536 = vmatpush1.bf16.msra.mxu0 %v284
  %537 = vmatprep.subr.bf16.mxu0 %v289
  %538 = vmatpush1.bf16.msra.mxu0 %v288
  %539 = vmatprep.subr.bf16.mxu0 %v293
  %540 = vmatpush1.bf16.msra.mxu0 %v292
  %541 = vmatprep.subr.bf16.mxu0 %v297
  %542 = vmatpush1.bf16.msra.mxu0 %v296
  %543 = vmatprep.subr.bf16.mxu0 %v301
  %544 = vmatpush1.bf16.msra.mxu0 %v300
  %545 = vmatprep.subr.bf16.mxu0 %v305
  %546 = vmatpush1.bf16.msra.mxu0 %v304
  %547 = vmatprep.subr.bf16.mxu0 0
  %548 = vmatpush1.bf16.msra.mxu0 0
  %549 = vmatprep.subr.bf16.mxu0 0
  %550 = vmatpush1.bf16.msra.mxu0 0
  %551 = vmatprep.subr.bf16.mxu0 0
  %552 = vmatpush1.bf16.msra.mxu0 0
  %553 = vmatprep.subr.bf16.mxu0 0
  %554 = vmatpush1.bf16.msra.mxu0 0
  %555 = vmatprep.subr.bf16.mxu0 0
  %556 = vmatpush1.bf16.msra.mxu0 0
  %557 = vmatprep.subr.bf16.mxu0 0
  %558 = vmatpush1.bf16.msra.mxu0 0
  %559 = vmatprep.subr.bf16.mxu0 0
  %560 = vmatpush1.bf16.msra.mxu0 0
  %561 = vmatprep.subr.bf16.mxu0 0
  %562 = vmatpush1.bf16.msra.mxu0 0
  %563 = vmatprep.mubr.bf16.mxu0 0
  %564 = vmatmul.mubr.bf16.gmra.mrb[0].mxu0 %v146
  %v565 = vpop.f32.mrb[0].mxu0
  %v566 = vadd.f32 0.0, %v565
  %v567 = vpop.f32.mrb[0].mxu0
  %v568 = vadd.f32 0.0, %v567
  %v569 = vpop.f32.mrb[0].mxu0
  %v570 = vadd.f32 0.0, %v569
  %v571 = vpop.f32.mrb[0].mxu0
  %v572 = vadd.f32 0.0, %v571
  %573 = vmatprep.mubr.bf16.mxu0 0
  %574 = vmatmul.mubr.bf16.gmra.mrb[0].mxu0 %v147
  %v575 = vpop.f32.mrb[0].mxu0
  %v576 = vadd.f32 0.0, %v575
  %v577 = vpop.f32.mrb[0].mxu0
  %v578 = vadd.f32 0.0, %v577
  %v579 = vpop.f32.mrb[0].mxu0
  %v580 = vadd.f32 0.0, %v579
  %v581 = vpop.f32.mrb[0].mxu0
  %v582 = vadd.f32 0.0, %v581
  %583 = vmatprep.mubr.bf16.mxu0 0
  %584 = vmatmul.mubr.bf16.gmra.mrb[0].mxu0 %v148
  %v585 = vpop.f32.mrb[0].mxu0
  %v586 = vadd.f32 0.0, %v585
  %v587 = vpop.f32.mrb[0].mxu0
  %v588 = vadd.f32 0.0, %v587
  %v589 = vpop.f32.mrb[0].mxu0
  %v590 = vadd.f32 0.0, %v589
  %v591 = vpop.f32.mrb[0].mxu0
  %v592 = vadd.f32 0.0, %v591
  %593 = vmatprep.mubr.bf16.mxu0 0
  %594 = vmatmul.mubr.bf16.gmra.mrb[0].mxu0 %v149
  %v595 = vpop.f32.mrb[0].mxu0
  %v596 = vadd.f32 0.0, %v595
  %v597 = vpop.f32.mrb[0].mxu0
  %v598 = vadd.f32 0.0, %v597
  %v599 = vpop.f32.mrb[0].mxu0
  %v600 = vadd.f32 0.0, %v599
  %v601 = vpop.f32.mrb[0].mxu0
  %v602 = vadd.f32 0.0, %v601
  %603 = vmatprep.mubr.bf16.mxu0 0
  %604 = vmatmul.mubr.bf16.gmra.mrb[0].mxu0 %v150
  %v605 = vpop.f32.mrb[0].mxu0
  %v606 = vadd.f32 0.0, %v605
  %v607 = vpop.f32.mrb[0].mxu0
  %v608 = vadd.f32 0.0, %v607
  %v609 = vpop.f32.mrb[0].mxu0
  %v610 = vadd.f32 0.0, %v609
  %v611 = vpop.f32.mrb[0].mxu0
  %v612 = vadd.f32 0.0, %v611
  %613 = vmatprep.mubr.bf16.mxu0 0
  %614 = vmatmul.mubr.bf16.gmra.mrb[0].mxu0 %v151
  %v615 = vpop.f32.mrb[0].mxu0
  %v616 = vadd.f32 0.0, %v615
  %v617 = vpop.f32.mrb[0].mxu0
  %v618 = vadd.f32 0.0, %v617
  %v619 = vpop.f32.mrb[0].mxu0
  %v620 = vadd.f32 0.0, %v619
  %v621 = vpop.f32.mrb[0].mxu0
  %v622 = vadd.f32 0.0, %v621
  %623 = vmatprep.mubr.bf16.mxu0 0
  %624 = vmatmul.mubr.bf16.gmra.mrb[0].mxu0 %v152
  %v625 = vpop.f32.mrb[0].mxu0
  %v626 = vadd.f32 0.0, %v625
  %v627 = vpop.f32.mrb[0].mxu0
  %v628 = vadd.f32 0.0, %v627
  %v629 = vpop.f32.mrb[0].mxu0
  %v630 = vadd.f32 0.0, %v629
  %v631 = vpop.f32.mrb[0].mxu0
  %v632 = vadd.f32 0.0, %v631
  %633 = vmatprep.mubr.bf16.mxu0 0
  %634 = vmatmul.mubr.bf16.gmra.mrb[0].mxu0 %v153
  %v635 = vpop.f32.mrb[0].mxu0
  %v636 = vadd.f32 0.0, %v635
  %v637 = vpop.f32.mrb[0].mxu0
  %v638 = vadd.f32 0.0, %v637
  %v639 = vpop.f32.mrb[0].mxu0
  %v640 = vadd.f32 0.0, %v639
  %v641 = vpop.f32.mrb[0].mxu0
  %v642 = vadd.f32 0.0, %v641
  %643 = vmatprep.mubr.bf16.mxu0 0
  %644 = vmatmul.mubr.bf16.gmra.mrb[0].mxu0 %v154
  %v645 = vpop.f32.mrb[0].mxu0
  %v646 = vadd.f32 0.0, %v645
  %v647 = vpop.f32.mrb[0].mxu0
  %v648 = vadd.f32 0.0, %v647
  %v649 = vpop.f32.mrb[0].mxu0
  %v650 = vadd.f32 0.0, %v649
  %v651 = vpop.f32.mrb[0].mxu0
  %v652 = vadd.f32 0.0, %v651
  %653 = vmatprep.mubr.bf16.mxu0 0
  %654 = vmatmul.mubr.bf16.gmra.mrb[0].mxu0 %v155
  %v655 = vpop.f32.mrb[0].mxu0
  %v656 = vadd.f32 0.0, %v655
  %v657 = vpop.f32.mrb[0].mxu0
  %v658 = vadd.f32 0.0, %v657
  %v659 = vpop.f32.mrb[0].mxu0
  %v660 = vadd.f32 0.0, %v659
  %v661 = vpop.f32.mrb[0].mxu0
  %v662 = vadd.f32 0.0, %v661
  %663 = vmatprep.mubr.bf16.mxu0 0
  %664 = vmatmul.mubr.bf16.gmra.mrb[0].mxu0 %v156
  %v665 = vpop.f32.mrb[0].mxu0
  %v666 = vadd.f32 0.0, %v665
  %v667 = vpop.f32.mrb[0].mxu0
  %v668 = vadd.f32 0.0, %v667
  %v669 = vpop.f32.mrb[0].mxu0
  %v670 = vadd.f32 0.0, %v669
  %v671 = vpop.f32.mrb[0].mxu0
  %v672 = vadd.f32 0.0, %v671
  %673 = vmatprep.mubr.bf16.mxu0 0
  %674 = vmatmul.mubr.bf16.gmra.mrb[0].mxu0 %v157
  %v675 = vpop.f32.mrb[0].mxu0
  %v676 = vadd.f32 0.0, %v675
  %v677 = vpop.f32.mrb[0].mxu0
  %v678 = vadd.f32 0.0, %v677
  %v679 = vpop.f32.mrb[0].mxu0
  %v680 = vadd.f32 0.0, %v679
  %v681 = vpop.f32.mrb[0].mxu0
  %v682 = vadd.f32 0.0, %v681
  %683 = vmatprep.mubr.bf16.mxu0 0
  %684 = vmatmul.mubr.bf16.gmra.mrb[0].mxu0 %v158
  %v685 = vpop.f32.mrb[0].mxu0
  %v686 = vadd.f32 0.0, %v685
  %v687 = vpop.f32.mrb[0].mxu0
  %v688 = vadd.f32 0.0, %v687
  %v689 = vpop.f32.mrb[0].mxu0
  %v690 = vadd.f32 0.0, %v689
  %v691 = vpop.f32.mrb[0].mxu0
  %v692 = vadd.f32 0.0, %v691
  %693 = vmatprep.mubr.bf16.mxu0 0
  %694 = vmatmul.mubr.bf16.gmra.mrb[0].mxu0 %v159
  %v695 = vpop.f32.mrb[0].mxu0
  %v696 = vadd.f32 0.0, %v695
  %v697 = vpop.f32.mrb[0].mxu0
  %v698 = vadd.f32 0.0, %v697
  %v699 = vpop.f32.mrb[0].mxu0
  %v700 = vadd.f32 0.0, %v699
  %v701 = vpop.f32.mrb[0].mxu0
  %v702 = vadd.f32 0.0, %v701
  %703 = vmatprep.mubr.bf16.mxu0 0
  %704 = vmatmul.mubr.bf16.gmra.mrb[0].mxu0 %v160
  %v705 = vpop.f32.mrb[0].mxu0
  %v706 = vadd.f32 0.0, %v705
  %v707 = vpop.f32.mrb[0].mxu0
  %v708 = vadd.f32 0.0, %v707
  %v709 = vpop.f32.mrb[0].mxu0
  %v710 = vadd.f32 0.0, %v709
  %v711 = vpop.f32.mrb[0].mxu0
  %v712 = vadd.f32 0.0, %v711
  %713 = vmatprep.mubr.bf16.mxu0 0
  %714 = vmatmul.mubr.bf16.gmra.mrb[0].mxu0 %v161
  %v715 = vpop.f32.mrb[0].mxu0
  %v716 = vadd.f32 0.0, %v715
  %v717 = vpop.f32.mrb[0].mxu0
  %v718 = vadd.f32 0.0, %v717
  %v719 = vpop.f32.mrb[0].mxu0
  %v720 = vadd.f32 0.0, %v719
  %v721 = vpop.f32.mrb[0].mxu0
  %v722 = vadd.f32 0.0, %v721
  %723 = vdwg.mxu0
  %v724 = vld [vmem:[%s1] sm:$0xf]
  %v725 = vld [vmem:[%s1 + $0x4] sm:$0xf]
  %v726 = vld [vmem:[%s1 + $0x8] sm:$0xf]
  %v727 = vld [vmem:[%s1 + $0xc] sm:$0xf]
  %v728 = vld [vmem:[%s1 + $0x10] sm:$0xf]
  %v729 = vld [vmem:[%s1 + $0x14] sm:$0xf]
  %v730 = vld [vmem:[%s1 + $0x18] sm:$0xf]
  %v731 = vld [vmem:[%s1 + $0x1c] sm:$0xf]
  %v732 = vld [vmem:[%s1 + $0x20] sm:$0xf]
  %v733 = vld [vmem:[%s1 + $0x24] sm:$0xf]
  %v734 = vld [vmem:[%s1 + $0x28] sm:$0xf]
  %v735 = vld [vmem:[%s1 + $0x2c] sm:$0xf]
  %v736 = vld [vmem:[%s1 + $0x30] sm:$0xf]
  %v737 = vld [vmem:[%s1 + $0x34] sm:$0xf]
  %v738 = vld [vmem:[%s1 + $0x38] sm:$0xf]
  %v739 = vld [vmem:[%s1 + $0x3c] sm:$0xf]
  %v740 = vld [vmem:[%s1 + $0x40] sm:$0xf]
  %v741 = vld [vmem:[%s1 + $0x44] sm:$0xf]
  %v742 = vld [vmem:[%s1 + $0x48] sm:$0xf]
  %v743 = vld [vmem:[%s1 + $0x4c] sm:$0xf]
  %v744 = vld [vmem:[%s1 + $0x50] sm:$0xf]
  %v745 = vld [vmem:[%s1 + $0x54] sm:$0xf]
  %v746 = vld [vmem:[%s1 + $0x58] sm:$0xf]
  %v747 = vld [vmem:[%s1 + $0x5c] sm:$0xf]
  %v748 = vld [vmem:[%s1 + $0x60] sm:$0xf]
  %v749 = vld [vmem:[%s1 + $0x64] sm:$0xf]
  %v750 = vld [vmem:[%s1 + $0x68] sm:$0xf]
  %v751 = vld [vmem:[%s1 + $0x6c] sm:$0xf]
  %v752 = vld [vmem:[%s1 + $0x70] sm:$0xf]
  %v753 = vld [vmem:[%s1 + $0x74] sm:$0xf]
  %v754 = vld [vmem:[%s1 + $0x78] sm:$0xf]
  %v755 = vld [vmem:[%s1 + $0x7c] sm:$0xf]
  %v756 = vld [vmem:[%s3] sm:$0xff]
  %v757 = vld [vmem:[%s3 + $0x8] sm:$0xff]
  %v758 = vld [vmem:[%s3 + $0x10] sm:$0xff]
  %v759 = vld [vmem:[%s3 + $0x18] sm:$0xff]
  %v760 = vld [vmem:[%s3 + $0x20] sm:$0xff]
  %v761 = vld [vmem:[%s3 + $0x28] sm:$0xff]
  %v762 = vld [vmem:[%s3 + $0x30] sm:$0xff]
  %v763 = vld [vmem:[%s3 + $0x38] sm:$0xff]
  %v764 = vld [vmem:[%s3 + $0x40] sm:$0xff]
  %v765 = vld [vmem:[%s3 + $0x48] sm:$0xff]
  %v766 = vld [vmem:[%s3 + $0x50] sm:$0xff]
  %v767 = vld [vmem:[%s3 + $0x58] sm:$0xff]
  %v768 = vld [vmem:[%s3 + $0x60] sm:$0xff]
  %v769 = vld [vmem:[%s3 + $0x68] sm:$0xff]
  %v770 = vld [vmem:[%s3 + $0x70] sm:$0xff]
  %v771 = vld [vmem:[%s3 + $0x78] sm:$0xff]
  %v804 = vunpack.c.l.b16 %v724
  %v805 = vunpack.c.l.b16 %v725
  %v806 = vunpack.c.l.b16 %v726
  %v807 = vunpack.c.l.b16 %v727
  %v808 = vunpack.c.l.b16 %v728
  %v809 = vunpack.c.l.b16 %v729
  %v810 = vunpack.c.l.b16 %v730
  %v811 = vunpack.c.l.b16 %v731
  %v812 = vunpack.c.l.b16 %v732
  %v813 = vunpack.c.l.b16 %v733
  %v814 = vunpack.c.l.b16 %v734
  %v815 = vunpack.c.l.b16 %v735
  %v816 = vunpack.c.l.b16 %v736
  %v817 = vunpack.c.l.b16 %v737
  %v818 = vunpack.c.l.b16 %v738
  %v819 = vunpack.c.l.b16 %v739
  %v820 = vunpack.c.l.b16 %v740
  %v821 = vunpack.c.l.b16 %v741
  %v822 = vunpack.c.l.b16 %v742
  %v823 = vunpack.c.l.b16 %v743
  %v824 = vunpack.c.l.b16 %v744
  %v825 = vunpack.c.l.b16 %v745
  %v826 = vunpack.c.l.b16 %v746
  %v827 = vunpack.c.l.b16 %v747
  %v828 = vunpack.c.l.b16 %v748
  %v829 = vunpack.c.l.b16 %v749
  %v830 = vunpack.c.l.b16 %v750
  %v831 = vunpack.c.l.b16 %v751
  %v832 = vunpack.c.l.b16 %v752
  %v833 = vunpack.c.l.b16 %v753
  %v834 = vunpack.c.l.b16 %v754
  %v835 = vunpack.c.l.b16 %v755
  %v836 = vpack.c.b16 %v805, %v804
  %v837 = vpack.c.b16 %v807, %v806
  %v838 = vpack.c.b16 %v809, %v808
  %v839 = vpack.c.b16 %v811, %v810
  %v840 = vpack.c.b16 %v813, %v812
  %v841 = vpack.c.b16 %v815, %v814
  %v842 = vpack.c.b16 %v817, %v816
  %v843 = vpack.c.b16 %v819, %v818
  %v844 = vpack.c.b16 %v821, %v820
  %v845 = vpack.c.b16 %v823, %v822
  %v846 = vpack.c.b16 %v825, %v824
  %v847 = vpack.c.b16 %v827, %v826
  %v848 = vpack.c.b16 %v829, %v828
  %v849 = vpack.c.b16 %v831, %v830
  %v850 = vpack.c.b16 %v833, %v832
  %v851 = vpack.c.b16 %v835, %v834
  %v868 = vunpack.c.l.b16 %v756
  %v869 = vunpack.c.h.b16 %v756
  %v870 = vunpack.c.l.b16 %v757
  %v871 = vunpack.c.h.b16 %v757
  %v872 = vunpack.c.l.b16 %v758
  %v873 = vunpack.c.h.b16 %v758
  %v874 = vunpack.c.l.b16 %v759
  %v875 = vunpack.c.h.b16 %v759
  %v876 = vunpack.c.l.b16 %v760
  %v877 = vunpack.c.h.b16 %v760
  %v878 = vunpack.c.l.b16 %v761
  %v879 = vunpack.c.h.b16 %v761
  %v880 = vunpack.c.l.b16 %v762
  %v881 = vunpack.c.h.b16 %v762
  %v882 = vunpack.c.l.b16 %v763
  %v883 = vunpack.c.h.b16 %v763
  %v884 = vunpack.c.l.b16 %v764
  %v885 = vunpack.c.h.b16 %v764
  %v886 = vunpack.c.l.b16 %v765
  %v887 = vunpack.c.h.b16 %v765
  %v888 = vunpack.c.l.b16 %v766
  %v889 = vunpack.c.h.b16 %v766
  %v890 = vunpack.c.l.b16 %v767
  %v891 = vunpack.c.h.b16 %v767
  %v892 = vunpack.c.l.b16 %v768
  %v893 = vunpack.c.h.b16 %v768
  %v894 = vunpack.c.l.b16 %v769
  %v895 = vunpack.c.h.b16 %v769
  %v896 = vunpack.c.l.b16 %v770
  %v897 = vunpack.c.h.b16 %v770
  %v898 = vunpack.c.l.b16 %v771
  %v899 = vunpack.c.h.b16 %v771
  %v900 = vpack.c.b16 %v872, %v868
  %v901 = vpack.c.b16 %v873, %v869
  %v902 = vpack.c.b16 %v874, %v870
  %v903 = vpack.c.b16 %v875, %v871
  %v904 = vpack.c.b16 %v880, %v876
  %v905 = vpack.c.b16 %v881, %v877
  %v906 = vpack.c.b16 %v882, %v878
  %v907 = vpack.c.b16 %v883, %v879
  %v908 = vpack.c.b16 %v888, %v884
  %v909 = vpack.c.b16 %v889, %v885
  %v910 = vpack.c.b16 %v890, %v886
  %v911 = vpack.c.b16 %v891, %v887
  %v912 = vpack.c.b16 %v896, %v892
  %v913 = vpack.c.b16 %v897, %v893
  %v914 = vpack.c.b16 %v898, %v894
  %v915 = vpack.c.b16 %v899, %v895
  %vm932 = vcmask 523264
  %v934 = vsel %vm932, %v836, 0
  %v937 = vsel %vm932, %v837, 0
  %v940 = vsel %vm932, %v838, 0
  %v943 = vsel %vm932, %v839, 0
  %v946 = vsel %vm932, %v840, 0
  %v949 = vsel %vm932, %v841, 0
  %v952 = vsel %vm932, %v842, 0
  %v955 = vsel %vm932, %v843, 0
  %v958 = vsel %vm932, %v844, 0
  %v961 = vsel %vm932, %v845, 0
  %v964 = vsel %vm932, %v846, 0
  %v967 = vsel %vm932, %v847, 0
  %v970 = vsel %vm932, %v848, 0
  %v973 = vsel %vm932, %v849, 0
  %v976 = vsel %vm932, %v850, 0
  %v979 = vsel %vm932, %v851, 0
  %981 = vmatprep.subr.bf16.mxu0 %v901
  %982 = vmatpush1.bf16.msra.mxu0 %v900
  %983 = vmatprep.subr.bf16.mxu0 %v905
  %984 = vmatpush1.bf16.msra.mxu0 %v904
  %985 = vmatprep.subr.bf16.mxu0 %v909
  %986 = vmatpush1.bf16.msra.mxu0 %v908
  %987 = vmatprep.subr.bf16.mxu0 %v913
  %988 = vmatpush1.bf16.msra.mxu0 %v912
  %989 = vmatprep.subr.bf16.mxu0 0
  %990 = vmatpush1.bf16.msra.mxu0 0
  %991 = vmatprep.subr.bf16.mxu0 0
  %992 = vmatpush1.bf16.msra.mxu0 0
  %993 = vmatprep.subr.bf16.mxu0 0
  %994 = vmatpush1.bf16.msra.mxu0 0
  %995 = vmatprep.subr.bf16.mxu0 0
  %996 = vmatpush1.bf16.msra.mxu0 0
  %997 = vmatprep.subr.bf16.mxu0 0
  %998 = vmatpush1.bf16.msra.mxu0 0
  %999 = vmatprep.subr.bf16.mxu0 0
  %1000 = vmatpush1.bf16.msra.mxu0 0
  %1001 = vmatprep.subr.bf16.mxu0 0
  %1002 = vmatpush1.bf16.msra.mxu0 0
  %1003 = vmatprep.subr.bf16.mxu0 0
  %1004 = vmatpush1.bf16.msra.mxu0 0
  %1005 = vmatprep.subr.bf16.mxu0 0
  %1006 = vmatpush1.bf16.msra.mxu0 0
  %1007 = vmatprep.subr.bf16.mxu0 0
  %1008 = vmatpush1.bf16.msra.mxu0 0
  %1009 = vmatprep.subr.bf16.mxu0 0
  %1010 = vmatpush1.bf16.msra.mxu0 0
  %1011 = vmatprep.subr.bf16.mxu0 0
  %1012 = vmatpush1.bf16.msra.mxu0 0
  %1013 = vmatprep.mubr.bf16.mxu0 0
  %1014 = vmatmul.mubr.bf16.gmra.mrb[0].mxu0 %v934
  %v1015 = vpop.f32.mrb[0].mxu0
  %v1016 = vadd.f32 0.0, %v1015
  %v1017 = vpop.f32.mrb[0].mxu0
  %v1018 = vadd.f32 0.0, %v1017
  %v1019 = vpop.f32.mrb[0].mxu0
  %v1020 = vadd.f32 0.0, %v1019
  %v1021 = vpop.f32.mrb[0].mxu0
  %v1022 = vadd.f32 0.0, %v1021
  %1023 = vmatprep.mubr.bf16.mxu0 0
  %1024 = vmatmul.mubr.bf16.gmra.mrb[0].mxu0 %v937
  %v1025 = vpop.f32.mrb[0].mxu0
  %v1026 = vadd.f32 0.0, %v1025
  %v1027 = vpop.f32.mrb[0].mxu0
  %v1028 = vadd.f32 0.0, %v1027
  %v1029 = vpop.f32.mrb[0].mxu0
  %v1030 = vadd.f32 0.0, %v1029
  %v1031 = vpop.f32.mrb[0].mxu0
  %v1032 = vadd.f32 0.0, %v1031
  %1033 = vmatprep.mubr.bf16.mxu0 0
  %1034 = vmatmul.mubr.bf16.gmra.mrb[0].mxu0 %v940
  %v1035 = vpop.f32.mrb[0].mxu0
  %v1036 = vadd.f32 0.0, %v1035
  %v1037 = vpop.f32.mrb[0].mxu0
  %v1038 = vadd.f32 0.0, %v1037
  %v1039 = vpop.f32.mrb[0].mxu0
  %v1040 = vadd.f32 0.0, %v1039
  %v1041 = vpop.f32.mrb[0].mxu0
  %v1042 = vadd.f32 0.0, %v1041
  %1043 = vmatprep.mubr.bf16.mxu0 0
  %1044 = vmatmul.mubr.bf16.gmra.mrb[0].mxu0 %v943
  %v1045 = vpop.f32.mrb[0].mxu0
  %v1046 = vadd.f32 0.0, %v1045
  %v1047 = vpop.f32.mrb[0].mxu0
  %v1048 = vadd.f32 0.0, %v1047
  %v1049 = vpop.f32.mrb[0].mxu0
  %v1050 = vadd.f32 0.0, %v1049
  %v1051 = vpop.f32.mrb[0].mxu0
  %v1052 = vadd.f32 0.0, %v1051
  %1053 = vmatprep.mubr.bf16.mxu0 0
  %1054 = vmatmul.mubr.bf16.gmra.mrb[0].mxu0 %v946
  %v1055 = vpop.f32.mrb[0].mxu0
  %v1056 = vadd.f32 0.0, %v1055
  %v1057 = vpop.f32.mrb[0].mxu0
  %v1058 = vadd.f32 0.0, %v1057
  %v1059 = vpop.f32.mrb[0].mxu0
  %v1060 = vadd.f32 0.0, %v1059
  %v1061 = vpop.f32.mrb[0].mxu0
  %v1062 = vadd.f32 0.0, %v1061
  %1063 = vmatprep.mubr.bf16.mxu0 0
  %1064 = vmatmul.mubr.bf16.gmra.mrb[0].mxu0 %v949
  %v1065 = vpop.f32.mrb[0].mxu0
  %v1066 = vadd.f32 0.0, %v1065
  %v1067 = vpop.f32.mrb[0].mxu0
  %v1068 = vadd.f32 0.0, %v1067
  %v1069 = vpop.f32.mrb[0].mxu0
  %v1070 = vadd.f32 0.0, %v1069
  %v1071 = vpop.f32.mrb[0].mxu0
  %v1072 = vadd.f32 0.0, %v1071
  %1073 = vmatprep.mubr.bf16.mxu0 0
  %1074 = vmatmul.mubr.bf16.gmra.mrb[0].mxu0 %v952
  %v1075 = vpop.f32.mrb[0].mxu0
  %v1076 = vadd.f32 0.0, %v1075
  %v1077 = vpop.f32.mrb[0].mxu0
  %v1078 = vadd.f32 0.0, %v1077
  %v1079 = vpop.f32.mrb[0].mxu0
  %v1080 = vadd.f32 0.0, %v1079
  %v1081 = vpop.f32.mrb[0].mxu0
  %v1082 = vadd.f32 0.0, %v1081
  %1083 = vmatprep.mubr.bf16.mxu0 0
  %1084 = vmatmul.mubr.bf16.gmra.mrb[0].mxu0 %v955
  %v1085 = vpop.f32.mrb[0].mxu0
  %v1086 = vadd.f32 0.0, %v1085
  %v1087 = vpop.f32.mrb[0].mxu0
  %v1088 = vadd.f32 0.0, %v1087
  %v1089 = vpop.f32.mrb[0].mxu0
  %v1090 = vadd.f32 0.0, %v1089
  %v1091 = vpop.f32.mrb[0].mxu0
  %v1092 = vadd.f32 0.0, %v1091
  %1093 = vmatprep.mubr.bf16.mxu0 0
  %1094 = vmatmul.mubr.bf16.gmra.mrb[0].mxu0 %v958
  %v1095 = vpop.f32.mrb[0].mxu0
  %v1096 = vadd.f32 0.0, %v1095
  %v1097 = vpop.f32.mrb[0].mxu0
  %v1098 = vadd.f32 0.0, %v1097
  %v1099 = vpop.f32.mrb[0].mxu0
  %v1100 = vadd.f32 0.0, %v1099
  %v1101 = vpop.f32.mrb[0].mxu0
  %v1102 = vadd.f32 0.0, %v1101
  %1103 = vmatprep.mubr.bf16.mxu0 0
  %1104 = vmatmul.mubr.bf16.gmra.mrb[0].mxu0 %v961
  %v1105 = vpop.f32.mrb[0].mxu0
  %v1106 = vadd.f32 0.0, %v1105
  %v1107 = vpop.f32.mrb[0].mxu0
  %v1108 = vadd.f32 0.0, %v1107
  %v1109 = vpop.f32.mrb[0].mxu0
  %v1110 = vadd.f32 0.0, %v1109
  %v1111 = vpop.f32.mrb[0].mxu0
  %v1112 = vadd.f32 0.0, %v1111
  %1113 = vmatprep.mubr.bf16.mxu0 0
  %1114 = vmatmul.mubr.bf16.gmra.mrb[0].mxu0 %v964
  %v1115 = vpop.f32.mrb[0].mxu0
  %v1116 = vadd.f32 0.0, %v1115
  %v1117 = vpop.f32.mrb[0].mxu0
  %v1118 = vadd.f32 0.0, %v1117
  %v1119 = vpop.f32.mrb[0].mxu0
  %v1120 = vadd.f32 0.0, %v1119
  %v1121 = vpop.f32.mrb[0].mxu0
  %v1122 = vadd.f32 0.0, %v1121
  %1123 = vmatprep.mubr.bf16.mxu0 0
  %1124 = vmatmul.mubr.bf16.gmra.mrb[0].mxu0 %v967
  %v1125 = vpop.f32.mrb[0].mxu0
  %v1126 = vadd.f32 0.0, %v1125
  %v1127 = vpop.f32.mrb[0].mxu0
  %v1128 = vadd.f32 0.0, %v1127
  %v1129 = vpop.f32.mrb[0].mxu0
  %v1130 = vadd.f32 0.0, %v1129
  %v1131 = vpop.f32.mrb[0].mxu0
  %v1132 = vadd.f32 0.0, %v1131
  %1133 = vmatprep.mubr.bf16.mxu0 0
  %1134 = vmatmul.mubr.bf16.gmra.mrb[0].mxu0 %v970
  %v1135 = vpop.f32.mrb[0].mxu0
  %v1136 = vadd.f32 0.0, %v1135
  %v1137 = vpop.f32.mrb[0].mxu0
  %v1138 = vadd.f32 0.0, %v1137
  %v1139 = vpop.f32.mrb[0].mxu0
  %v1140 = vadd.f32 0.0, %v1139
  %v1141 = vpop.f32.mrb[0].mxu0
  %v1142 = vadd.f32 0.0, %v1141
  %1143 = vmatprep.mubr.bf16.mxu0 0
  %1144 = vmatmul.mubr.bf16.gmra.mrb[0].mxu0 %v973
  %v1145 = vpop.f32.mrb[0].mxu0
  %v1146 = vadd.f32 0.0, %v1145
  %v1147 = vpop.f32.mrb[0].mxu0
  %v1148 = vadd.f32 0.0, %v1147
  %v1149 = vpop.f32.mrb[0].mxu0
  %v1150 = vadd.f32 0.0, %v1149
  %v1151 = vpop.f32.mrb[0].mxu0
  %v1152 = vadd.f32 0.0, %v1151
  %1153 = vmatprep.mubr.bf16.mxu0 0
  %1154 = vmatmul.mubr.bf16.gmra.mrb[0].mxu0 %v976
  %v1155 = vpop.f32.mrb[0].mxu0
  %v1156 = vadd.f32 0.0, %v1155
  %v1157 = vpop.f32.mrb[0].mxu0
  %v1158 = vadd.f32 0.0, %v1157
  %v1159 = vpop.f32.mrb[0].mxu0
  %v1160 = vadd.f32 0.0, %v1159
  %v1161 = vpop.f32.mrb[0].mxu0
  %v1162 = vadd.f32 0.0, %v1161
  %1163 = vmatprep.mubr.bf16.mxu0 0
  %1164 = vmatmul.mubr.bf16.gmra.mrb[0].mxu0 %v979
  %v1165 = vpop.f32.mrb[0].mxu0
  %v1166 = vadd.f32 0.0, %v1165
  %v1167 = vpop.f32.mrb[0].mxu0
  %v1168 = vadd.f32 0.0, %v1167
  %v1169 = vpop.f32.mrb[0].mxu0
  %v1170 = vadd.f32 0.0, %v1169
  %v1171 = vpop.f32.mrb[0].mxu0
  %v1172 = vadd.f32 0.0, %v1171
  %1173 = vdwg.mxu0
  %1174 = vmatprep.subr.bf16.mxu0 %v903
  %1175 = vmatpush1.bf16.msra.mxu0 %v902
  %1176 = vmatprep.subr.bf16.mxu0 %v907
  %1177 = vmatpush1.bf16.msra.mxu0 %v906
  %1178 = vmatprep.subr.bf16.mxu0 %v911
  %1179 = vmatpush1.bf16.msra.mxu0 %v910
  %1180 = vmatprep.subr.bf16.mxu0 %v915
  %1181 = vmatpush1.bf16.msra.mxu0 %v914
  %1182 = vmatprep.subr.bf16.mxu0 0
  %1183 = vmatpush1.bf16.msra.mxu0 0
  %1184 = vmatprep.subr.bf16.mxu0 0
  %1185 = vmatpush1.bf16.msra.mxu0 0
  %1186 = vmatprep.subr.bf16.mxu0 0
  %1187 = vmatpush1.bf16.msra.mxu0 0
  %1188 = vmatprep.subr.bf16.mxu0 0
  %1189 = vmatpush1.bf16.msra.mxu0 0
  %1190 = vmatprep.subr.bf16.mxu0 0
  %1191 = vmatpush1.bf16.msra.mxu0 0
  %1192 = vmatprep.subr.bf16.mxu0 0
  %1193 = vmatpush1.bf16.msra.mxu0 0
  %1194 = vmatprep.subr.bf16.mxu0 0
  %1195 = vmatpush1.bf16.msra.mxu0 0
  %1196 = vmatprep.subr.bf16.mxu0 0
  %1197 = vmatpush1.bf16.msra.mxu0 0
  %1198 = vmatprep.subr.bf16.mxu0 0
  %1199 = vmatpush1.bf16.msra.mxu0 0
  %1200 = vmatprep.subr.bf16.mxu0 0
  %1201 = vmatpush1.bf16.msra.mxu0 0
  %1202 = vmatprep.subr.bf16.mxu0 0
  %1203 = vmatpush1.bf16.msra.mxu0 0
  %1204 = vmatprep.subr.bf16.mxu0 0
  %1205 = vmatpush1.bf16.msra.mxu0 0
  %1206 = vmatprep.mubr.bf16.mxu0 0
  %1207 = vmatmul.mubr.bf16.gmra.mrb[0].mxu0 %v934
  %v1208 = vpop.f32.mrb[0].mxu0
  %v1209 = vadd.f32 0.0, %v1208
  %v1210 = vpop.f32.mrb[0].mxu0
  %v1211 = vadd.f32 0.0, %v1210
  %v1212 = vpop.f32.mrb[0].mxu0
  %v1213 = vadd.f32 0.0, %v1212
  %v1214 = vpop.f32.mrb[0].mxu0
  %v1215 = vadd.f32 0.0, %v1214
  %1216 = vmatprep.mubr.bf16.mxu0 0
  %1217 = vmatmul.mubr.bf16.gmra.mrb[0].mxu0 %v937
  %v1218 = vpop.f32.mrb[0].mxu0
  %v1219 = vadd.f32 0.0, %v1218
  %v1220 = vpop.f32.mrb[0].mxu0
  %v1221 = vadd.f32 0.0, %v1220
  %v1222 = vpop.f32.mrb[0].mxu0
  %v1223 = vadd.f32 0.0, %v1222
  %v1224 = vpop.f32.mrb[0].mxu0
  %v1225 = vadd.f32 0.0, %v1224
  %1226 = vmatprep.mubr.bf16.mxu0 0
  %1227 = vmatmul.mubr.bf16.gmra.mrb[0].mxu0 %v940
  %v1228 = vpop.f32.mrb[0].mxu0
  %v1229 = vadd.f32 0.0, %v1228
  %v1230 = vpop.f32.mrb[0].mxu0
  %v1231 = vadd.f32 0.0, %v1230
  %v1232 = vpop.f32.mrb[0].mxu0
  %v1233 = vadd.f32 0.0, %v1232
  %v1234 = vpop.f32.mrb[0].mxu0
  %v1235 = vadd.f32 0.0, %v1234
  %1236 = vmatprep.mubr.bf16.mxu0 0
  %1237 = vmatmul.mubr.bf16.gmra.mrb[0].mxu0 %v943
  %v1238 = vpop.f32.mrb[0].mxu0
  %v1239 = vadd.f32 0.0, %v1238
  %v1240 = vpop.f32.mrb[0].mxu0
  %v1241 = vadd.f32 0.0, %v1240
  %v1242 = vpop.f32.mrb[0].mxu0
  %v1243 = vadd.f32 0.0, %v1242
  %v1244 = vpop.f32.mrb[0].mxu0
  %v1245 = vadd.f32 0.0, %v1244
  %1246 = vmatprep.mubr.bf16.mxu0 0
  %1247 = vmatmul.mubr.bf16.gmra.mrb[0].mxu0 %v946
  %v1248 = vpop.f32.mrb[0].mxu0
  %v1249 = vadd.f32 0.0, %v1248
  %v1250 = vpop.f32.mrb[0].mxu0
  %v1251 = vadd.f32 0.0, %v1250
  %v1252 = vpop.f32.mrb[0].mxu0
  %v1253 = vadd.f32 0.0, %v1252
  %v1254 = vpop.f32.mrb[0].mxu0
  %v1255 = vadd.f32 0.0, %v1254
  %1256 = vmatprep.mubr.bf16.mxu0 0
  %1257 = vmatmul.mubr.bf16.gmra.mrb[0].mxu0 %v949
  %v1258 = vpop.f32.mrb[0].mxu0
  %v1259 = vadd.f32 0.0, %v1258
  %v1260 = vpop.f32.mrb[0].mxu0
  %v1261 = vadd.f32 0.0, %v1260
  %v1262 = vpop.f32.mrb[0].mxu0
  %v1263 = vadd.f32 0.0, %v1262
  %v1264 = vpop.f32.mrb[0].mxu0
  %v1265 = vadd.f32 0.0, %v1264
  %1266 = vmatprep.mubr.bf16.mxu0 0
  %1267 = vmatmul.mubr.bf16.gmra.mrb[0].mxu0 %v952
  %v1268 = vpop.f32.mrb[0].mxu0
  %v1269 = vadd.f32 0.0, %v1268
  %v1270 = vpop.f32.mrb[0].mxu0
  %v1271 = vadd.f32 0.0, %v1270
  %v1272 = vpop.f32.mrb[0].mxu0
  %v1273 = vadd.f32 0.0, %v1272
  %v1274 = vpop.f32.mrb[0].mxu0
  %v1275 = vadd.f32 0.0, %v1274
  %1276 = vmatprep.mubr.bf16.mxu0 0
  %1277 = vmatmul.mubr.bf16.gmra.mrb[0].mxu0 %v955
  %v1278 = vpop.f32.mrb[0].mxu0
  %v1279 = vadd.f32 0.0, %v1278
  %v1280 = vpop.f32.mrb[0].mxu0
  %v1281 = vadd.f32 0.0, %v1280
  %v1282 = vpop.f32.mrb[0].mxu0
  %v1283 = vadd.f32 0.0, %v1282
  %v1284 = vpop.f32.mrb[0].mxu0
  %v1285 = vadd.f32 0.0, %v1284
  %1286 = vmatprep.mubr.bf16.mxu0 0
  %1287 = vmatmul.mubr.bf16.gmra.mrb[0].mxu0 %v958
  %v1288 = vpop.f32.mrb[0].mxu0
  %v1289 = vadd.f32 0.0, %v1288
  %v1290 = vpop.f32.mrb[0].mxu0
  %v1291 = vadd.f32 0.0, %v1290
  %v1292 = vpop.f32.mrb[0].mxu0
  %v1293 = vadd.f32 0.0, %v1292
  %v1294 = vpop.f32.mrb[0].mxu0
  %v1295 = vadd.f32 0.0, %v1294
  %1296 = vmatprep.mubr.bf16.mxu0 0
  %1297 = vmatmul.mubr.bf16.gmra.mrb[0].mxu0 %v961
  %v1298 = vpop.f32.mrb[0].mxu0
  %v1299 = vadd.f32 0.0, %v1298
  %v1300 = vpop.f32.mrb[0].mxu0
  %v1301 = vadd.f32 0.0, %v1300
  %v1302 = vpop.f32.mrb[0].mxu0
  %v1303 = vadd.f32 0.0, %v1302
  %v1304 = vpop.f32.mrb[0].mxu0
  %v1305 = vadd.f32 0.0, %v1304
  %1306 = vmatprep.mubr.bf16.mxu0 0
  %1307 = vmatmul.mubr.bf16.gmra.mrb[0].mxu0 %v964
  %v1308 = vpop.f32.mrb[0].mxu0
  %v1309 = vadd.f32 0.0, %v1308
  %v1310 = vpop.f32.mrb[0].mxu0
  %v1311 = vadd.f32 0.0, %v1310
  %v1312 = vpop.f32.mrb[0].mxu0
  %v1313 = vadd.f32 0.0, %v1312
  %v1314 = vpop.f32.mrb[0].mxu0
  %v1315 = vadd.f32 0.0, %v1314
  %1316 = vmatprep.mubr.bf16.mxu0 0
  %1317 = vmatmul.mubr.bf16.gmra.mrb[0].mxu0 %v967
  %v1318 = vpop.f32.mrb[0].mxu0
  %v1319 = vadd.f32 0.0, %v1318
  %v1320 = vpop.f32.mrb[0].mxu0
  %v1321 = vadd.f32 0.0, %v1320
  %v1322 = vpop.f32.mrb[0].mxu0
  %v1323 = vadd.f32 0.0, %v1322
  %v1324 = vpop.f32.mrb[0].mxu0
  %v1325 = vadd.f32 0.0, %v1324
  %1326 = vmatprep.mubr.bf16.mxu0 0
  %1327 = vmatmul.mubr.bf16.gmra.mrb[0].mxu0 %v970
  %v1328 = vpop.f32.mrb[0].mxu0
  %v1329 = vadd.f32 0.0, %v1328
  %v1330 = vpop.f32.mrb[0].mxu0
  %v1331 = vadd.f32 0.0, %v1330
  %v1332 = vpop.f32.mrb[0].mxu0
  %v1333 = vadd.f32 0.0, %v1332
  %v1334 = vpop.f32.mrb[0].mxu0
  %v1335 = vadd.f32 0.0, %v1334
  %1336 = vmatprep.mubr.bf16.mxu0 0
  %1337 = vmatmul.mubr.bf16.gmra.mrb[0].mxu0 %v973
  %v1338 = vpop.f32.mrb[0].mxu0
  %v1339 = vadd.f32 0.0, %v1338
  %v1340 = vpop.f32.mrb[0].mxu0
  %v1341 = vadd.f32 0.0, %v1340
  %v1342 = vpop.f32.mrb[0].mxu0
  %v1343 = vadd.f32 0.0, %v1342
  %v1344 = vpop.f32.mrb[0].mxu0
  %v1345 = vadd.f32 0.0, %v1344
  %1346 = vmatprep.mubr.bf16.mxu0 0
  %1347 = vmatmul.mubr.bf16.gmra.mrb[0].mxu0 %v976
  %v1348 = vpop.f32.mrb[0].mxu0
  %v1349 = vadd.f32 0.0, %v1348
  %v1350 = vpop.f32.mrb[0].mxu0
  %v1351 = vadd.f32 0.0, %v1350
  %v1352 = vpop.f32.mrb[0].mxu0
  %v1353 = vadd.f32 0.0, %v1352
  %v1354 = vpop.f32.mrb[0].mxu0
  %v1355 = vadd.f32 0.0, %v1354
  %1356 = vmatprep.mubr.bf16.mxu0 0
  %1357 = vmatmul.mubr.bf16.gmra.mrb[0].mxu0 %v979
  %v1358 = vpop.f32.mrb[0].mxu0
  %v1359 = vadd.f32 0.0, %v1358
  %v1360 = vpop.f32.mrb[0].mxu0
  %v1361 = vadd.f32 0.0, %v1360
  %v1362 = vpop.f32.mrb[0].mxu0
  %v1363 = vadd.f32 0.0, %v1362
  %v1364 = vpop.f32.mrb[0].mxu0
  %v1365 = vadd.f32 0.0, %v1364
  %1366 = vdwg.mxu0
  %v1367 = vmul.f32 %v373, %v1016
  %v1368 = vmul.f32 %v375, %v1018
  %v1369 = vmul.f32 %v377, %v1020
  %v1370 = vmul.f32 %v379, %v1022
  %v1371 = vmul.f32 %v383, %v1026
  %v1372 = vmul.f32 %v385, %v1028
  %v1373 = vmul.f32 %v387, %v1030
  %v1374 = vmul.f32 %v389, %v1032
  %v1375 = vmul.f32 %v393, %v1036
  %v1376 = vmul.f32 %v395, %v1038
  %v1377 = vmul.f32 %v397, %v1040
  %v1378 = vmul.f32 %v399, %v1042
  %v1379 = vmul.f32 %v403, %v1046
  %v1380 = vmul.f32 %v405, %v1048
  %v1381 = vmul.f32 %v407, %v1050
  %v1382 = vmul.f32 %v409, %v1052
  %v1383 = vmul.f32 %v413, %v1056
  %v1384 = vmul.f32 %v415, %v1058
  %v1385 = vmul.f32 %v417, %v1060
  %v1386 = vmul.f32 %v419, %v1062
  %v1387 = vmul.f32 %v423, %v1066
  %v1388 = vmul.f32 %v425, %v1068
  %v1389 = vmul.f32 %v427, %v1070
  %v1390 = vmul.f32 %v429, %v1072
  %v1391 = vmul.f32 %v433, %v1076
  %v1392 = vmul.f32 %v435, %v1078
  %v1393 = vmul.f32 %v437, %v1080
  %v1394 = vmul.f32 %v439, %v1082
  %v1395 = vmul.f32 %v443, %v1086
  %v1396 = vmul.f32 %v445, %v1088
  %v1397 = vmul.f32 %v447, %v1090
  %v1398 = vmul.f32 %v449, %v1092
  %v1399 = vmul.f32 %v453, %v1096
  %v1400 = vmul.f32 %v455, %v1098
  %v1401 = vmul.f32 %v457, %v1100
  %v1402 = vmul.f32 %v459, %v1102
  %v1403 = vmul.f32 %v463, %v1106
  %v1404 = vmul.f32 %v465, %v1108
  %v1405 = vmul.f32 %v467, %v1110
  %v1406 = vmul.f32 %v469, %v1112
  %v1407 = vmul.f32 %v473, %v1116
  %v1408 = vmul.f32 %v475, %v1118
  %v1409 = vmul.f32 %v477, %v1120
  %v1410 = vmul.f32 %v479, %v1122
  %v1411 = vmul.f32 %v483, %v1126
  %v1412 = vmul.f32 %v485, %v1128
  %v1413 = vmul.f32 %v487, %v1130
  %v1414 = vmul.f32 %v489, %v1132
  %v1415 = vmul.f32 %v493, %v1136
  %v1416 = vmul.f32 %v495, %v1138
  %v1417 = vmul.f32 %v497, %v1140
  %v1418 = vmul.f32 %v499, %v1142
  %v1419 = vmul.f32 %v503, %v1146
  %v1420 = vmul.f32 %v505, %v1148
  %v1421 = vmul.f32 %v507, %v1150
  %v1422 = vmul.f32 %v509, %v1152
  %v1423 = vmul.f32 %v513, %v1156
  %v1424 = vmul.f32 %v515, %v1158
  %v1425 = vmul.f32 %v517, %v1160
  %v1426 = vmul.f32 %v519, %v1162
  %v1427 = vmul.f32 %v523, %v1166
  %v1428 = vmul.f32 %v525, %v1168
  %v1429 = vmul.f32 %v527, %v1170
  %v1430 = vmul.f32 %v529, %v1172
  %v1431 = vmul.f32 %v566, %v1209
  %v1432 = vmul.f32 %v568, %v1211
  %v1433 = vmul.f32 %v570, %v1213
  %v1434 = vmul.f32 %v572, %v1215
  %v1435 = vmul.f32 %v576, %v1219
  %v1436 = vmul.f32 %v578, %v1221
  %v1437 = vmul.f32 %v580, %v1223
  %v1438 = vmul.f32 %v582, %v1225
  %v1439 = vmul.f32 %v586, %v1229
  %v1440 = vmul.f32 %v588, %v1231
  %v1441 = vmul.f32 %v590, %v1233
  %v1442 = vmul.f32 %v592, %v1235
  %v1443 = vmul.f32 %v596, %v1239
  %v1444 = vmul.f32 %v598, %v1241
  %v1445 = vmul.f32 %v600, %v1243
  %v1446 = vmul.f32 %v602, %v1245
  %v1447 = vmul.f32 %v606, %v1249
  %v1448 = vmul.f32 %v608, %v1251
  %v1449 = vmul.f32 %v610, %v1253
  %v1450 = vmul.f32 %v612, %v1255
  %v1451 = vmul.f32 %v616, %v1259
  %v1452 = vmul.f32 %v618, %v1261
  %v1453 = vmul.f32 %v620, %v1263
  %v1454 = vmul.f32 %v622, %v1265
  %v1455 = vmul.f32 %v626, %v1269
  %v1456 = vmul.f32 %v628, %v1271
  %v1457 = vmul.f32 %v630, %v1273
  %v1458 = vmul.f32 %v632, %v1275
  %v1459 = vmul.f32 %v636, %v1279
  %v1460 = vmul.f32 %v638, %v1281
  %v1461 = vmul.f32 %v640, %v1283
  %v1462 = vmul.f32 %v642, %v1285
  %v1463 = vmul.f32 %v646, %v1289
  %v1464 = vmul.f32 %v648, %v1291
  %v1465 = vmul.f32 %v650, %v1293
  %v1466 = vmul.f32 %v652, %v1295
  %v1467 = vmul.f32 %v656, %v1299
  %v1468 = vmul.f32 %v658, %v1301
  %v1469 = vmul.f32 %v660, %v1303
  %v1470 = vmul.f32 %v662, %v1305
  %v1471 = vmul.f32 %v666, %v1309
  %v1472 = vmul.f32 %v668, %v1311
  %v1473 = vmul.f32 %v670, %v1313
  %v1474 = vmul.f32 %v672, %v1315
  %v1475 = vmul.f32 %v676, %v1319
  %v1476 = vmul.f32 %v678, %v1321
  %v1477 = vmul.f32 %v680, %v1323
  %v1478 = vmul.f32 %v682, %v1325
  %v1479 = vmul.f32 %v686, %v1329
  %v1480 = vmul.f32 %v688, %v1331
  %v1481 = vmul.f32 %v690, %v1333
  %v1482 = vmul.f32 %v692, %v1335
  %v1483 = vmul.f32 %v696, %v1339
  %v1484 = vmul.f32 %v698, %v1341
  %v1485 = vmul.f32 %v700, %v1343
  %v1486 = vmul.f32 %v702, %v1345
  %v1487 = vmul.f32 %v706, %v1349
  %v1488 = vmul.f32 %v708, %v1351
  %v1489 = vmul.f32 %v710, %v1353
  %v1490 = vmul.f32 %v712, %v1355
  %v1491 = vmul.f32 %v716, %v1359
  %v1492 = vmul.f32 %v718, %v1361
  %v1493 = vmul.f32 %v720, %v1363
  %v1494 = vmul.f32 %v722, %v1365
  %v1495 = vsub.f32 %v1367, %v1431
  %v1496 = vsub.f32 %v1368, %v1432
  %v1497 = vsub.f32 %v1369, %v1433
  %v1498 = vsub.f32 %v1370, %v1434
  %v1499 = vsub.f32 %v1371, %v1435
  %v1500 = vsub.f32 %v1372, %v1436
  %v1501 = vsub.f32 %v1373, %v1437
  %v1502 = vsub.f32 %v1374, %v1438
  %v1503 = vsub.f32 %v1375, %v1439
  %v1504 = vsub.f32 %v1376, %v1440
  %v1505 = vsub.f32 %v1377, %v1441
  %v1506 = vsub.f32 %v1378, %v1442
  %v1507 = vsub.f32 %v1379, %v1443
  %v1508 = vsub.f32 %v1380, %v1444
  %v1509 = vsub.f32 %v1381, %v1445
  %v1510 = vsub.f32 %v1382, %v1446
  %v1511 = vsub.f32 %v1383, %v1447
  %v1512 = vsub.f32 %v1384, %v1448
  %v1513 = vsub.f32 %v1385, %v1449
  %v1514 = vsub.f32 %v1386, %v1450
  %v1515 = vsub.f32 %v1387, %v1451
  %v1516 = vsub.f32 %v1388, %v1452
  %v1517 = vsub.f32 %v1389, %v1453
  %v1518 = vsub.f32 %v1390, %v1454
  %v1519 = vsub.f32 %v1391, %v1455
  %v1520 = vsub.f32 %v1392, %v1456
  %v1521 = vsub.f32 %v1393, %v1457
  %v1522 = vsub.f32 %v1394, %v1458
  %v1523 = vsub.f32 %v1395, %v1459
  %v1524 = vsub.f32 %v1396, %v1460
  %v1525 = vsub.f32 %v1397, %v1461
  %v1526 = vsub.f32 %v1398, %v1462
  %v1527 = vsub.f32 %v1399, %v1463
  %v1528 = vsub.f32 %v1400, %v1464
  %v1529 = vsub.f32 %v1401, %v1465
  %v1530 = vsub.f32 %v1402, %v1466
  %v1531 = vsub.f32 %v1403, %v1467
  %v1532 = vsub.f32 %v1404, %v1468
  %v1533 = vsub.f32 %v1405, %v1469
  %v1534 = vsub.f32 %v1406, %v1470
  %v1535 = vsub.f32 %v1407, %v1471
  %v1536 = vsub.f32 %v1408, %v1472
  %v1537 = vsub.f32 %v1409, %v1473
  %v1538 = vsub.f32 %v1410, %v1474
  %v1539 = vsub.f32 %v1411, %v1475
  %v1540 = vsub.f32 %v1412, %v1476
  %v1541 = vsub.f32 %v1413, %v1477
  %v1542 = vsub.f32 %v1414, %v1478
  %v1543 = vsub.f32 %v1415, %v1479
  %v1544 = vsub.f32 %v1416, %v1480
  %v1545 = vsub.f32 %v1417, %v1481
  %v1546 = vsub.f32 %v1418, %v1482
  %v1547 = vsub.f32 %v1419, %v1483
  %v1548 = vsub.f32 %v1420, %v1484
  %v1549 = vsub.f32 %v1421, %v1485
  %v1550 = vsub.f32 %v1422, %v1486
  %v1551 = vsub.f32 %v1423, %v1487
  %v1552 = vsub.f32 %v1424, %v1488
  %v1553 = vsub.f32 %v1425, %v1489
  %v1554 = vsub.f32 %v1426, %v1490
  %v1555 = vsub.f32 %v1427, %v1491
  %v1556 = vsub.f32 %v1428, %v1492
  %v1557 = vsub.f32 %v1429, %v1493
  %v1558 = vsub.f32 %v1430, %v1494
  %v1559 = vmul.f32 %v373, %v1209
  %v1560 = vmul.f32 %v375, %v1211
  %v1561 = vmul.f32 %v377, %v1213
  %v1562 = vmul.f32 %v379, %v1215
  %v1563 = vmul.f32 %v383, %v1219
  %v1564 = vmul.f32 %v385, %v1221
  %v1565 = vmul.f32 %v387, %v1223
  %v1566 = vmul.f32 %v389, %v1225
  %v1567 = vmul.f32 %v393, %v1229
  %v1568 = vmul.f32 %v395, %v1231
  %v1569 = vmul.f32 %v397, %v1233
  %v1570 = vmul.f32 %v399, %v1235
  %v1571 = vmul.f32 %v403, %v1239
  %v1572 = vmul.f32 %v405, %v1241
  %v1573 = vmul.f32 %v407, %v1243
  %v1574 = vmul.f32 %v409, %v1245
  %v1575 = vmul.f32 %v413, %v1249
  %v1576 = vmul.f32 %v415, %v1251
  %v1577 = vmul.f32 %v417, %v1253
  %v1578 = vmul.f32 %v419, %v1255
  %v1579 = vmul.f32 %v423, %v1259
  %v1580 = vmul.f32 %v425, %v1261
  %v1581 = vmul.f32 %v427, %v1263
  %v1582 = vmul.f32 %v429, %v1265
  %v1583 = vmul.f32 %v433, %v1269
  %v1584 = vmul.f32 %v435, %v1271
  %v1585 = vmul.f32 %v437, %v1273
  %v1586 = vmul.f32 %v439, %v1275
  %v1587 = vmul.f32 %v443, %v1279
  %v1588 = vmul.f32 %v445, %v1281
  %v1589 = vmul.f32 %v447, %v1283
  %v1590 = vmul.f32 %v449, %v1285
  %v1591 = vmul.f32 %v453, %v1289
  %v1592 = vmul.f32 %v455, %v1291
  %v1593 = vmul.f32 %v457, %v1293
  %v1594 = vmul.f32 %v459, %v1295
  %v1595 = vmul.f32 %v463, %v1299
  %v1596 = vmul.f32 %v465, %v1301
  %v1597 = vmul.f32 %v467, %v1303
  %v1598 = vmul.f32 %v469, %v1305
  %v1599 = vmul.f32 %v473, %v1309
  %v1600 = vmul.f32 %v475, %v1311
  %v1601 = vmul.f32 %v477, %v1313
  %v1602 = vmul.f32 %v479, %v1315
  %v1603 = vmul.f32 %v483, %v1319
  %v1604 = vmul.f32 %v485, %v1321
  %v1605 = vmul.f32 %v487, %v1323
  %v1606 = vmul.f32 %v489, %v1325
  %v1607 = vmul.f32 %v493, %v1329
  %v1608 = vmul.f32 %v495, %v1331
  %v1609 = vmul.f32 %v497, %v1333
  %v1610 = vmul.f32 %v499, %v1335
  %v1611 = vmul.f32 %v503, %v1339
  %v1612 = vmul.f32 %v505, %v1341
  %v1613 = vmul.f32 %v507, %v1343
  %v1614 = vmul.f32 %v509, %v1345
  %v1615 = vmul.f32 %v513, %v1349
  %v1616 = vmul.f32 %v515, %v1351
  %v1617 = vmul.f32 %v517, %v1353
  %v1618 = vmul.f32 %v519, %v1355
  %v1619 = vmul.f32 %v523, %v1359
  %v1620 = vmul.f32 %v525, %v1361
  %v1621 = vmul.f32 %v527, %v1363
  %v1622 = vmul.f32 %v529, %v1365
  %v1623 = vmul.f32 %v566, %v1016
  %v1624 = vmul.f32 %v568, %v1018
  %v1625 = vmul.f32 %v570, %v1020
  %v1626 = vmul.f32 %v572, %v1022
  %v1627 = vmul.f32 %v576, %v1026
  %v1628 = vmul.f32 %v578, %v1028
  %v1629 = vmul.f32 %v580, %v1030
  %v1630 = vmul.f32 %v582, %v1032
  %v1631 = vmul.f32 %v586, %v1036
  %v1632 = vmul.f32 %v588, %v1038
  %v1633 = vmul.f32 %v590, %v1040
  %v1634 = vmul.f32 %v592, %v1042
  %v1635 = vmul.f32 %v596, %v1046
  %v1636 = vmul.f32 %v598, %v1048
  %v1637 = vmul.f32 %v600, %v1050
  %v1638 = vmul.f32 %v602, %v1052
  %v1639 = vmul.f32 %v606, %v1056
  %v1640 = vmul.f32 %v608, %v1058
  %v1641 = vmul.f32 %v610, %v1060
  %v1642 = vmul.f32 %v612, %v1062
  %v1643 = vmul.f32 %v616, %v1066
  %v1644 = vmul.f32 %v618, %v1068
  %v1645 = vmul.f32 %v620, %v1070
  %v1646 = vmul.f32 %v622, %v1072
  %v1647 = vmul.f32 %v626, %v1076
  %v1648 = vmul.f32 %v628, %v1078
  %v1649 = vmul.f32 %v630, %v1080
  %v1650 = vmul.f32 %v632, %v1082
  %v1651 = vmul.f32 %v636, %v1086
  %v1652 = vmul.f32 %v638, %v1088
  %v1653 = vmul.f32 %v640, %v1090
  %v1654 = vmul.f32 %v642, %v1092
  %v1655 = vmul.f32 %v646, %v1096
  %v1656 = vmul.f32 %v648, %v1098
  %v1657 = vmul.f32 %v650, %v1100
  %v1658 = vmul.f32 %v652, %v1102
  %v1659 = vmul.f32 %v656, %v1106
  %v1660 = vmul.f32 %v658, %v1108
  %v1661 = vmul.f32 %v660, %v1110
  %v1662 = vmul.f32 %v662, %v1112
  %v1663 = vmul.f32 %v666, %v1116
  %v1664 = vmul.f32 %v668, %v1118
  %v1665 = vmul.f32 %v670, %v1120
  %v1666 = vmul.f32 %v672, %v1122
  %v1667 = vmul.f32 %v676, %v1126
  %v1668 = vmul.f32 %v678, %v1128
  %v1669 = vmul.f32 %v680, %v1130
  %v1670 = vmul.f32 %v682, %v1132
  %v1671 = vmul.f32 %v686, %v1136
  %v1672 = vmul.f32 %v688, %v1138
  %v1673 = vmul.f32 %v690, %v1140
  %v1674 = vmul.f32 %v692, %v1142
  %v1675 = vmul.f32 %v696, %v1146
  %v1676 = vmul.f32 %v698, %v1148
  %v1677 = vmul.f32 %v700, %v1150
  %v1678 = vmul.f32 %v702, %v1152
  %v1679 = vmul.f32 %v706, %v1156
  %v1680 = vmul.f32 %v708, %v1158
  %v1681 = vmul.f32 %v710, %v1160
  %v1682 = vmul.f32 %v712, %v1162
  %v1683 = vmul.f32 %v716, %v1166
  %v1684 = vmul.f32 %v718, %v1168
  %v1685 = vmul.f32 %v720, %v1170
  %v1686 = vmul.f32 %v722, %v1172
  %v1687 = vadd.f32 %v1559, %v1623
  %v1688 = vadd.f32 %v1560, %v1624
  %v1689 = vadd.f32 %v1561, %v1625
  %v1690 = vadd.f32 %v1562, %v1626
  %v1691 = vadd.f32 %v1563, %v1627
  %v1692 = vadd.f32 %v1564, %v1628
  %v1693 = vadd.f32 %v1565, %v1629
  %v1694 = vadd.f32 %v1566, %v1630
  %v1695 = vadd.f32 %v1567, %v1631
  %v1696 = vadd.f32 %v1568, %v1632
  %v1697 = vadd.f32 %v1569, %v1633
  %v1698 = vadd.f32 %v1570, %v1634
  %v1699 = vadd.f32 %v1571, %v1635
  %v1700 = vadd.f32 %v1572, %v1636
  %v1701 = vadd.f32 %v1573, %v1637
  %v1702 = vadd.f32 %v1574, %v1638
  %v1703 = vadd.f32 %v1575, %v1639
  %v1704 = vadd.f32 %v1576, %v1640
  %v1705 = vadd.f32 %v1577, %v1641
  %v1706 = vadd.f32 %v1578, %v1642
  %v1707 = vadd.f32 %v1579, %v1643
  %v1708 = vadd.f32 %v1580, %v1644
  %v1709 = vadd.f32 %v1581, %v1645
  %v1710 = vadd.f32 %v1582, %v1646
  %v1711 = vadd.f32 %v1583, %v1647
  %v1712 = vadd.f32 %v1584, %v1648
  %v1713 = vadd.f32 %v1585, %v1649
  %v1714 = vadd.f32 %v1586, %v1650
  %v1715 = vadd.f32 %v1587, %v1651
  %v1716 = vadd.f32 %v1588, %v1652
  %v1717 = vadd.f32 %v1589, %v1653
  %v1718 = vadd.f32 %v1590, %v1654
  %v1719 = vadd.f32 %v1591, %v1655
  %v1720 = vadd.f32 %v1592, %v1656
  %v1721 = vadd.f32 %v1593, %v1657
  %v1722 = vadd.f32 %v1594, %v1658
  %v1723 = vadd.f32 %v1595, %v1659
  %v1724 = vadd.f32 %v1596, %v1660
  %v1725 = vadd.f32 %v1597, %v1661
  %v1726 = vadd.f32 %v1598, %v1662
  %v1727 = vadd.f32 %v1599, %v1663
  %v1728 = vadd.f32 %v1600, %v1664
  %v1729 = vadd.f32 %v1601, %v1665
  %v1730 = vadd.f32 %v1602, %v1666
  %v1731 = vadd.f32 %v1603, %v1667
  %v1732 = vadd.f32 %v1604, %v1668
  %v1733 = vadd.f32 %v1605, %v1669
  %v1734 = vadd.f32 %v1606, %v1670
  %v1735 = vadd.f32 %v1607, %v1671
  %v1736 = vadd.f32 %v1608, %v1672
  %v1737 = vadd.f32 %v1609, %v1673
  %v1738 = vadd.f32 %v1610, %v1674
  %v1739 = vadd.f32 %v1611, %v1675
  %v1740 = vadd.f32 %v1612, %v1676
  %v1741 = vadd.f32 %v1613, %v1677
  %v1742 = vadd.f32 %v1614, %v1678
  %v1743 = vadd.f32 %v1615, %v1679
  %v1744 = vadd.f32 %v1616, %v1680
  %v1745 = vadd.f32 %v1617, %v1681
  %v1746 = vadd.f32 %v1618, %v1682
  %v1747 = vadd.f32 %v1619, %v1683
  %v1748 = vadd.f32 %v1620, %v1684
  %v1749 = vadd.f32 %v1621, %v1685
  %v1750 = vadd.f32 %v1622, %v1686
  %v1751 = vadd.f32 %v1495, %v1497
  %v1752 = vadd.f32 %v1751, %v1499
  %v1753 = vadd.f32 %v1752, %v1501
  %v1754 = vadd.f32 %v1753, %v1503
  %v1755 = vadd.f32 %v1754, %v1505
  %v1756 = vadd.f32 %v1755, %v1507
  %v1757 = vadd.f32 %v1756, %v1509
  %v1758 = vrot.slane %v1757, 4
  %v1759 = vadd.f32 %v1757, %v1758
  %v1760 = vrot.slane %v1759, 2
  %v1761 = vadd.f32 %v1759, %v1760
  %v1762 = vrot.slane %v1761, 1
  %v1763 = vadd.f32 %v1761, %v1762
  %v1764 = vadd.f32 %v1496, %v1498
  %v1765 = vadd.f32 %v1764, %v1500
  %v1766 = vadd.f32 %v1765, %v1502
  %v1767 = vadd.f32 %v1766, %v1504
  %v1768 = vadd.f32 %v1767, %v1506
  %v1769 = vadd.f32 %v1768, %v1508
  %v1770 = vadd.f32 %v1769, %v1510
  %v1771 = vrot.slane %v1770, 4
  %v1772 = vadd.f32 %v1770, %v1771
  %v1773 = vrot.slane %v1772, 2
  %v1774 = vadd.f32 %v1772, %v1773
  %v1775 = vrot.slane %v1774, 1
  %v1776 = vadd.f32 %v1774, %v1775
  %v1777 = vadd.f32 %v1511, %v1513
  %v1778 = vadd.f32 %v1777, %v1515
  %v1779 = vadd.f32 %v1778, %v1517
  %v1780 = vadd.f32 %v1779, %v1519
  %v1781 = vadd.f32 %v1780, %v1521
  %v1782 = vadd.f32 %v1781, %v1523
  %v1783 = vadd.f32 %v1782, %v1525
  %v1784 = vrot.slane %v1783, 4
  %v1785 = vadd.f32 %v1783, %v1784
  %v1786 = vrot.slane %v1785, 2
  %v1787 = vadd.f32 %v1785, %v1786
  %v1788 = vrot.slane %v1787, 1
  %v1789 = vadd.f32 %v1787, %v1788
  %v1790 = vadd.f32 %v1512, %v1514
  %v1791 = vadd.f32 %v1790, %v1516
  %v1792 = vadd.f32 %v1791, %v1518
  %v1793 = vadd.f32 %v1792, %v1520
  %v1794 = vadd.f32 %v1793, %v1522
  %v1795 = vadd.f32 %v1794, %v1524
  %v1796 = vadd.f32 %v1795, %v1526
  %v1797 = vrot.slane %v1796, 4
  %v1798 = vadd.f32 %v1796, %v1797
  %v1799 = vrot.slane %v1798, 2
  %v1800 = vadd.f32 %v1798, %v1799
  %v1801 = vrot.slane %v1800, 1
  %v1802 = vadd.f32 %v1800, %v1801
  %v1803 = vadd.f32 %v1527, %v1529
  %v1804 = vadd.f32 %v1803, %v1531
  %v1805 = vadd.f32 %v1804, %v1533
  %v1806 = vadd.f32 %v1805, %v1535
  %v1807 = vadd.f32 %v1806, %v1537
  %v1808 = vadd.f32 %v1807, %v1539
  %v1809 = vadd.f32 %v1808, %v1541
  %v1810 = vrot.slane %v1809, 4
  %v1811 = vadd.f32 %v1809, %v1810
  %v1812 = vrot.slane %v1811, 2
  %v1813 = vadd.f32 %v1811, %v1812
  %v1814 = vrot.slane %v1813, 1
  %v1815 = vadd.f32 %v1813, %v1814
  %v1816 = vadd.f32 %v1528, %v1530
  %v1817 = vadd.f32 %v1816, %v1532
  %v1818 = vadd.f32 %v1817, %v1534
  %v1819 = vadd.f32 %v1818, %v1536
  %v1820 = vadd.f32 %v1819, %v1538
  %v1821 = vadd.f32 %v1820, %v1540
  %v1822 = vadd.f32 %v1821, %v1542
  %v1823 = vrot.slane %v1822, 4
  %v1824 = vadd.f32 %v1822, %v1823
  %v1825 = vrot.slane %v1824, 2
  %v1826 = vadd.f32 %v1824, %v1825
  %v1827 = vrot.slane %v1826, 1
  %v1828 = vadd.f32 %v1826, %v1827
  %v1829 = vadd.f32 %v1543, %v1545
  %v1830 = vadd.f32 %v1829, %v1547
  %v1831 = vadd.f32 %v1830, %v1549
  %v1832 = vadd.f32 %v1831, %v1551
  %v1833 = vadd.f32 %v1832, %v1553
  %v1834 = vadd.f32 %v1833, %v1555
  %v1835 = vadd.f32 %v1834, %v1557
  %v1836 = vrot.slane %v1835, 4
  %v1837 = vadd.f32 %v1835, %v1836
  %v1838 = vrot.slane %v1837, 2
  %v1839 = vadd.f32 %v1837, %v1838
  %v1840 = vrot.slane %v1839, 1
  %v1841 = vadd.f32 %v1839, %v1840
  %v1842 = vadd.f32 %v1544, %v1546
  %v1843 = vadd.f32 %v1842, %v1548
  %v1844 = vadd.f32 %v1843, %v1550
  %v1845 = vadd.f32 %v1844, %v1552
  %v1846 = vadd.f32 %v1845, %v1554
  %v1847 = vadd.f32 %v1846, %v1556
  %v1848 = vadd.f32 %v1847, %v1558
  %v1849 = vrot.slane %v1848, 4
  %v1850 = vadd.f32 %v1848, %v1849
  %v1851 = vrot.slane %v1850, 2
  %v1852 = vadd.f32 %v1850, %v1851
  %v1853 = vrot.slane %v1852, 1
  %v1854 = vadd.f32 %v1852, %v1853
  %v1863 = vcombine.low %v1763, %v1776
  %v1864 = vcombine.low %v1789, %v1802
  %v1865 = vcombine.low %v1815, %v1828
  %v1866 = vcombine.low %v1841, %v1854
  %v1867 = vrot.slane %v1864, 7
  %vm1868 = vcmask 1041409
  %v1869 = vsel %vm1868, %v1867, %v1863
  %vm1870 = vcmask 1045509
  %v1871 = vsel %vm1870, %v1867, %v1869
  %v1872 = vrot.slane %v1865, 6
  %vm1873 = vcmask 1042434
  %v1874 = vsel %vm1873, %v1872, %v1871
  %vm1875 = vcmask 1046534
  %v1876 = vsel %vm1875, %v1872, %v1874
  %v1877 = vrot.slane %v1866, 5
  %vm1878 = vcmask 1043459
  %v1879 = vsel %vm1878, %v1877, %v1876
  %vm1880 = vcmask 1047559
  %v1881 = vsel %vm1880, %v1877, %v1879
  %1883 = vst [vmem:[%s4] sm:$0xff] %v1881
  %v1884 = vadd.f32 %v1687, %v1689
  %v1885 = vadd.f32 %v1884, %v1691
  %v1886 = vadd.f32 %v1885, %v1693
  %v1887 = vadd.f32 %v1886, %v1695
  %v1888 = vadd.f32 %v1887, %v1697
  %v1889 = vadd.f32 %v1888, %v1699
  %v1890 = vadd.f32 %v1889, %v1701
  %v1891 = vrot.slane %v1890, 4
  %v1892 = vadd.f32 %v1890, %v1891
  %v1893 = vrot.slane %v1892, 2
  %v1894 = vadd.f32 %v1892, %v1893
  %v1895 = vrot.slane %v1894, 1
  %v1896 = vadd.f32 %v1894, %v1895
  %v1897 = vadd.f32 %v1688, %v1690
  %v1898 = vadd.f32 %v1897, %v1692
  %v1899 = vadd.f32 %v1898, %v1694
  %v1900 = vadd.f32 %v1899, %v1696
  %v1901 = vadd.f32 %v1900, %v1698
  %v1902 = vadd.f32 %v1901, %v1700
  %v1903 = vadd.f32 %v1902, %v1702
  %v1904 = vrot.slane %v1903, 4
  %v1905 = vadd.f32 %v1903, %v1904
  %v1906 = vrot.slane %v1905, 2
  %v1907 = vadd.f32 %v1905, %v1906
  %v1908 = vrot.slane %v1907, 1
  %v1909 = vadd.f32 %v1907, %v1908
  %v1910 = vadd.f32 %v1703, %v1705
  %v1911 = vadd.f32 %v1910, %v1707
  %v1912 = vadd.f32 %v1911, %v1709
  %v1913 = vadd.f32 %v1912, %v1711
  %v1914 = vadd.f32 %v1913, %v1713
  %v1915 = vadd.f32 %v1914, %v1715
  %v1916 = vadd.f32 %v1915, %v1717
  %v1917 = vrot.slane %v1916, 4
  %v1918 = vadd.f32 %v1916, %v1917
  %v1919 = vrot.slane %v1918, 2
  %v1920 = vadd.f32 %v1918, %v1919
  %v1921 = vrot.slane %v1920, 1
  %v1922 = vadd.f32 %v1920, %v1921
  %v1923 = vadd.f32 %v1704, %v1706
  %v1924 = vadd.f32 %v1923, %v1708
  %v1925 = vadd.f32 %v1924, %v1710
  %v1926 = vadd.f32 %v1925, %v1712
  %v1927 = vadd.f32 %v1926, %v1714
  %v1928 = vadd.f32 %v1927, %v1716
  %v1929 = vadd.f32 %v1928, %v1718
  %v1930 = vrot.slane %v1929, 4
  %v1931 = vadd.f32 %v1929, %v1930
  %v1932 = vrot.slane %v1931, 2
  %v1933 = vadd.f32 %v1931, %v1932
  %v1934 = vrot.slane %v1933, 1
  %v1935 = vadd.f32 %v1933, %v1934
  %v1936 = vadd.f32 %v1719, %v1721
  %v1937 = vadd.f32 %v1936, %v1723
  %v1938 = vadd.f32 %v1937, %v1725
  %v1939 = vadd.f32 %v1938, %v1727
  %v1940 = vadd.f32 %v1939, %v1729
  %v1941 = vadd.f32 %v1940, %v1731
  %v1942 = vadd.f32 %v1941, %v1733
  %v1943 = vrot.slane %v1942, 4
  %v1944 = vadd.f32 %v1942, %v1943
  %v1945 = vrot.slane %v1944, 2
  %v1946 = vadd.f32 %v1944, %v1945
  %v1947 = vrot.slane %v1946, 1
  %v1948 = vadd.f32 %v1946, %v1947
  %v1949 = vadd.f32 %v1720, %v1722
  %v1950 = vadd.f32 %v1949, %v1724
  %v1951 = vadd.f32 %v1950, %v1726
  %v1952 = vadd.f32 %v1951, %v1728
  %v1953 = vadd.f32 %v1952, %v1730
  %v1954 = vadd.f32 %v1953, %v1732
  %v1955 = vadd.f32 %v1954, %v1734
  %v1956 = vrot.slane %v1955, 4
  %v1957 = vadd.f32 %v1955, %v1956
  %v1958 = vrot.slane %v1957, 2
  %v1959 = vadd.f32 %v1957, %v1958
  %v1960 = vrot.slane %v1959, 1
  %v1961 = vadd.f32 %v1959, %v1960
  %v1962 = vadd.f32 %v1735, %v1737
  %v1963 = vadd.f32 %v1962, %v1739
  %v1964 = vadd.f32 %v1963, %v1741
  %v1965 = vadd.f32 %v1964, %v1743
  %v1966 = vadd.f32 %v1965, %v1745
  %v1967 = vadd.f32 %v1966, %v1747
  %v1968 = vadd.f32 %v1967, %v1749
  %v1969 = vrot.slane %v1968, 4
  %v1970 = vadd.f32 %v1968, %v1969
  %v1971 = vrot.slane %v1970, 2
  %v1972 = vadd.f32 %v1970, %v1971
  %v1973 = vrot.slane %v1972, 1
  %v1974 = vadd.f32 %v1972, %v1973
  %v1975 = vadd.f32 %v1736, %v1738
  %v1976 = vadd.f32 %v1975, %v1740
  %v1977 = vadd.f32 %v1976, %v1742
  %v1978 = vadd.f32 %v1977, %v1744
  %v1979 = vadd.f32 %v1978, %v1746
  %v1980 = vadd.f32 %v1979, %v1748
  %v1981 = vadd.f32 %v1980, %v1750
  %v1982 = vrot.slane %v1981, 4
  %v1983 = vadd.f32 %v1981, %v1982
  %v1984 = vrot.slane %v1983, 2
  %v1985 = vadd.f32 %v1983, %v1984
  %v1986 = vrot.slane %v1985, 1
  %v1987 = vadd.f32 %v1985, %v1986
  %v1996 = vcombine.low %v1896, %v1909
  %v1997 = vcombine.low %v1922, %v1935
  %v1998 = vcombine.low %v1948, %v1961
  %v1999 = vcombine.low %v1974, %v1987
  %v2000 = vrot.slane %v1997, 7
  %v2001 = vsel %vm1868, %v2000, %v1996
  %v2002 = vsel %vm1870, %v2000, %v2001
  %v2003 = vrot.slane %v1998, 6
  %v2004 = vsel %vm1873, %v2003, %v2002
  %v2005 = vsel %vm1875, %v2003, %v2004
  %v2006 = vrot.slane %v1999, 5
  %v2007 = vsel %vm1878, %v2006, %v2005
  %v2008 = vsel %vm1880, %v2006, %v2007
  %2010 = vst [vmem:[%s4 + $0x8] sm:$0xff] %v2008
  // Predicated region
  $region18: #{bilinear_pooling.1} parent=0 // pred_check
    _
  $region19: #{bilinear_pooling.1} parent=0 // pred_check_branch
    %2012 = sbr.rel (0) target = $region21
  $region20: #{bilinear_pooling.1} parent=0 // pred_region
    _
  $region21: #{bilinear_pooling.1} parent=0 // pred_fallthru
    _
  // Predicated region
  $region22: #{bilinear_pooling.1} parent=0 // pred_check
    _
  $region23: #{bilinear_pooling.1} parent=0 // pred_check_branch
    %2014 = sbr.rel (0) target = $region25
  $region24: #{bilinear_pooling.1} parent=0 // pred_region
    _
  $region25: #{bilinear_pooling.1} parent=0 // pred_fallthru
    _

</llo_original>
